<compile_context>
chip_gen: v6e
topology: v6e:2x2x1
jax: 0.10.0
libtpu: 0.0.40
codegen_flags: <defaults>
</compile_context>

<pallas_src>
import functools

import jax
import jax.numpy as jnp
from jax import lax
from jax.experimental import pallas as pl
from jax.experimental.pallas import tpu as pltpu


def block_kernel(x_ref, tl_ref, w1_ref, b1_ref, w2_ref, b2_ref, wr_ref, br_ref,
                 out_ref, xh, hh, xs, hs, *, H, W, PADH, res_identity):
    # x_ref  : (1, Cin,  H*W)      f32   one image, flattened NCHW (unpadded)
    # tl_ref : (1, Cout, 1)        f32   hoisted time_mlp + label_mlp term
    # w1_ref : (Cout, 9*Cin)       bf16  conv1 weights, K ordered (tap, cin)
    # w2_ref : (Cout, 9*Cout)      bf16  conv2 weights
    # wr_ref : (Cout, Cin)         bf16  residual 1x1 conv weights (or dummy)
    # out_ref: (1, Cout, H*W)      f32
    # xh     : (Cin,  H*W + 2*PADH) bf16 scratch: halo'd bf16 copy of x
    # hh     : (Cout, H*W + 2*PADH) bf16 scratch: halo'd bf16 copy of h1
    # xs     : (9*Cin,  H*W)       bf16 scratch: stacked conv1 operand
    # hs     : (9*Cout, H*W)       bf16 scratch: stacked conv2 operand
    HW = H * W
    Cin = x_ref.shape[1]
    Cout = out_ref.shape[1]

    # Grid-invariant column-validity masks, built in-kernel (no DMA).
    col = lax.broadcasted_iota(jnp.int32, (1, HW), 1) % W
    ml = jnp.where(col >= 1, 1.0, 0.0).astype(jnp.bfloat16)       # kw == 0 tap
    mr = jnp.where(col <= W - 2, 1.0, 0.0).astype(jnp.bfloat16)   # kw == 2 tap

    # Weights/biases loaded once per grid step as values (no per-tap ref loads).
    w1 = w1_ref[...]
    w2 = w2_ref[...]
    b1 = b1_ref[...]
    b2 = b2_ref[...]
    tl = tl_ref[0]                                                # (Cout, 1)

    def build_taps(src, dst, C):
        # Write the 9 shifted taps of `src` ((C, HW+2*PADH) bf16, zero halo)
        # into `dst` ((9*C, HW) bf16), masking the flattened-axis column wrap.
        for kh in range(3):
            for kw in range(3):
                t = kh * 3 + kw
                s = (kh - 1) * W + (kw - 1)
                tap = src[:, PADH + s:PADH + s + HW]
                if kw == 0:
                    tap = tap * ml
                elif kw == 2:
                    tap = tap * mr
                dst[t * C:(t + 1) * C, :] = tap

    # ---- stage x once in bf16 with a zero lane halo (single cast) ----------
    xh[:, :PADH] = jnp.zeros((Cin, PADH), jnp.bfloat16)
    xh[:, PADH + HW:] = jnp.zeros((Cin, PADH), jnp.bfloat16)
    xh[:, PADH:PADH + HW] = x_ref[0].astype(jnp.bfloat16)

    # ---- conv1: one fused K = 9*Cin MXU contraction, bias, ReLU, +tl -------
    build_taps(xh, xs, Cin)
    h1 = jnp.dot(w1, xs[...], preferred_element_type=jnp.float32)
    h1 = jnp.maximum(h1 + b1, 0.0) + tl

    # ---- conv2: stage h1 (bf16, zero halo), fused K = 9*Cout contraction ---
    hh[:, :PADH] = jnp.zeros((Cout, PADH), jnp.bfloat16)
    hh[:, PADH + HW:] = jnp.zeros((Cout, PADH), jnp.bfloat16)
    hh[:, PADH:PADH + HW] = h1.astype(jnp.bfloat16)
    build_taps(hh, hs, Cout)
    h2 = jnp.dot(w2, hs[...], preferred_element_type=jnp.float32)
    h2 = jnp.maximum(h2 + b2, 0.0)

    # ---- residual path ------------------------------------------------------
    if res_identity:
        res = x_ref[0]                                 # exact f32 identity
    else:
        res = jnp.dot(wr_ref[...], xh[:, PADH:PADH + HW],
                      preferred_element_type=jnp.float32) + br_ref[...]

    out_ref[0] = h2 + res                              # lane-dense f32 store


def block_forward(x_nchw, time_emb, label_emb, params):
    """Pallas-backed Block.forward.

    x_nchw : (N, Cin, H, W) float32
    params : PyTorch-layout weights:
       w1 (Cout,Cin,3,3) b1 (Cout,)  w2 (Cout,Cout,3,3) b2 (Cout,)
       wt (Cout,Tdim)    bt (Cout,)  wl (Cout,Ldim)     bl (Cout,)
       wr (Cout,Cin,1,1) br (Cout,)  [wr/br omitted when Cin == Cout]
    """
    N, Cin, H, W = x_nchw.shape
    Cout = params["w1"].shape[0]
    HW = H * W
    PADH = W + 1                      # true minimum halo (max tap |shift|)

    # ---------------- wrapper-side layout prep (plain JAX glue) -------------
    x_flat = x_nchw.reshape(N, Cin, HW).astype(jnp.float32)   # no padding

    # Hoisted time/label MLPs -> one additive (N, Cout, 1) term (exact f32).
    tl = time_emb @ params["wt"].T + params["bt"]
    if label_emb is not None:
        tl = tl + label_emb @ params["wl"].T + params["bl"]
    tl = tl.reshape(N, Cout, 1).astype(jnp.float32)

    # Fused-tap weight stacks (Cout, 9*C), K ordered (tap = kh*3+kw, channel),
    # matching the stacked operand built in-kernel; bf16 for the MXU.
    w1s = jnp.transpose(params["w1"], (0, 2, 3, 1)).reshape(Cout, 9 * Cin)
    w2s = jnp.transpose(params["w2"], (0, 2, 3, 1)).reshape(Cout, 9 * Cout)
    w1s = w1s.astype(jnp.bfloat16)
    w2s = w2s.astype(jnp.bfloat16)
    b1 = params["b1"].reshape(Cout, 1).astype(jnp.float32)
    b2 = params["b2"].reshape(Cout, 1).astype(jnp.float32)

    res_identity = "wr" not in params
    if res_identity:
        wr = jnp.zeros((Cout, Cin), jnp.bfloat16)              # unused dummies
        br = jnp.zeros((Cout, 1), jnp.float32)
    else:
        wr = params["wr"][:, :, 0, 0].astype(jnp.bfloat16)
        br = params["br"].reshape(Cout, 1).astype(jnp.float32)

    # Explicit VMEM budget: double-buffered per-step blocks + weights + scratch.
    est = (2 * (Cin * HW + Cout * HW + Cout) * 4
           + 2 * 2 * (9 * Cin * Cout + 9 * Cout * Cout + Cin * Cout)
           + 2 * 3 * Cout * 4
           + 2 * ((Cin + Cout) * (HW + 2 * PADH) + 9 * (Cin + Cout) * HW))
    vmem_limit = int(min(max(4 * est, 8 * 2 ** 20), 64 * 2 ** 20))

    kernel = functools.partial(block_kernel, H=H, W=W, PADH=PADH,
                               res_identity=res_identity)
    full2d = lambda i: (0, 0)

    out_flat = pl.pallas_call(
        kernel,
        out_shape=jax.ShapeDtypeStruct((N, Cout, HW), jnp.float32),
        grid=(N,),                                   # one image per grid step
        in_specs=[
            pl.BlockSpec((1, Cin, HW), lambda i: (i, 0, 0)),     # x
            pl.BlockSpec((1, Cout, 1), lambda i: (i, 0, 0)),     # tl
            pl.BlockSpec((Cout, 9 * Cin), full2d),               # w1 (fetched once)
            pl.BlockSpec((Cout, 1), full2d),                     # b1
            pl.BlockSpec((Cout, 9 * Cout), full2d),              # w2
            pl.BlockSpec((Cout, 1), full2d),                     # b2
            pl.BlockSpec((Cout, Cin), full2d),                   # wr
            pl.BlockSpec((Cout, 1), full2d),                     # br
        ],
        out_specs=pl.BlockSpec((1, Cout, HW), lambda i: (i, 0, 0)),
        scratch_shapes=[
            pltpu.VMEM((Cin, HW + 2 * PADH), jnp.bfloat16),      # xh
            pltpu.VMEM((Cout, HW + 2 * PADH), jnp.bfloat16),     # hh
            pltpu.VMEM((9 * Cin, HW), jnp.bfloat16),             # xs
            pltpu.VMEM((9 * Cout, HW), jnp.bfloat16),            # hs
        ],
        compiler_params=pltpu.CompilerParams(
            # Independent images -> shards across v7x's two TensorCores.
            dimension_semantics=("parallel",),
            vmem_limit_bytes=vmem_limit),
    )(x_flat, tl, w1s, b1, w2s, b2, wr, br)

    return out_flat.reshape(N, Cout, H, W)


# ---------------- pure-JAX reference (for correctness check) ----------------
def ref_block(x, temb, lemb, p):
    def conv(z, w, b):
        y = lax.conv_general_dilated(
            z, w, window_strides=(1, 1), padding="SAME",
            dimension_numbers=("NCHW", "OIHW", "NCHW"))
        return y + b[None, :, None, None]

    residual = conv(x, p["wr"], p["br"]) if "wr" in p else x
    h = jax.nn.relu(conv(x, p["w1"], p["b1"]))
    h = h + (temb @ p["wt"].T + p["bt"])[:, :, None, None]
    if lemb is not None:
        h = h + (lemb @ p["wl"].T + p["bl"])[:, :, None, None]
    h = jax.nn.relu(conv(h, p["w2"], p["b2"]))
    return h + residual


if __name__ == "__main__":
    N, Cin, Cout, H, W = 2, 4, 8, 16, 16
    Tdim, Ldim = 32, 32

    key = jax.random.PRNGKey(0)
    ks = jax.random.split(key, 16)

    # Deterministic "PyTorch-like" init (OIHW conv weights, (out,in) linears).
    def u(k, shape, fan_in):
        bound = 1.0 / jnp.sqrt(float(fan_in))
        return jax.random.uniform(k, shape, jnp.float32, -bound, bound)

    params = {
        "w1": u(ks[0], (Cout, Cin, 3, 3), Cin * 9),
        "b1": u(ks[1], (Cout,), Cin * 9),
        "w2": u(ks[2], (Cout, Cout, 3, 3), Cout * 9),
        "b2": u(ks[3], (Cout,), Cout * 9),
        "wt": u(ks[4], (Cout, Tdim), Tdim),
        "bt": u(ks[5], (Cout,), Tdim),
        "wl": u(ks[6], (Cout, Ldim), Ldim),
        "bl": u(ks[7], (Cout,), Ldim),
        "wr": u(ks[8], (Cout, Cin, 1, 1), Cin),
        "br": u(ks[9], (Cout,), Cin),
    }

    x = jax.random.normal(ks[10], (N, Cin, H, W), jnp.float32)
    time_emb = jax.random.normal(ks[11], (N, Tdim), jnp.float32)
    label_emb = jax.random.normal(ks[12], (N, Ldim), jnp.float32)

    fwd = jax.jit(block_forward)
    out = jax.block_until_ready(fwd(x, time_emb, label_emb, params))
    ref = jax.block_until_ready(ref_block(x, time_emb, label_emb, params))

    assert out.shape == (N, Cout, H, W)
    max_err = float(jnp.max(jnp.abs(out - ref)))
    # bf16 MXU operands with f32 accumulation -> slightly relaxed tolerance.
    assert jnp.allclose(out, ref, atol=2e-2, rtol=2e-2), max_err
    print("KERNEL_OK")
</pallas_src>

<mosaic_0001>
module attributes {stable_mosaic.version = 11 : i64} {
  func.func @block_kernel(%arg0: i32, %arg1: memref<1x4x256xf32, #tpu.memory_space<vmem>>, %arg2: memref<1x8x1xf32, #tpu.memory_space<vmem>>, %arg3: memref<8x36xbf16, #tpu.memory_space<vmem>>, %arg4: memref<8x1xf32, #tpu.memory_space<vmem>>, %arg5: memref<8x72xbf16, #tpu.memory_space<vmem>>, %arg6: memref<8x1xf32, #tpu.memory_space<vmem>>, %arg7: memref<8x4xbf16, #tpu.memory_space<vmem>>, %arg8: memref<8x1xf32, #tpu.memory_space<vmem>>, %arg9: memref<1x8x256xf32, #tpu.memory_space<vmem>>, %arg10: memref<4x290xbf16, #tpu.memory_space<vmem>>, %arg11: memref<8x290xbf16, #tpu.memory_space<vmem>>, %arg12: memref<36x256xbf16, #tpu.memory_space<vmem>>, %arg13: memref<72x256xbf16, #tpu.memory_space<vmem>>) attributes {dimension_semantics = [#tpu.dimension_semantics<parallel>], iteration_bounds = array<i64: 2>, scalar_prefetch = 0 : i64, scratch_operands = 4 : i64, tpu.core_type = #tpu.core_type<tc>, window_params = [{transform_indices = @transform_0, window_bounds = array<i64: 1, 4, 256>}, {transform_indices = @transform_1, window_bounds = array<i64: 1, 8, 1>}, {pipeline_mode = #tpu.pipeline_mode<synchronous>, transform_indices = @transform_2, window_bounds = array<i64: 8, 36>}, {pipeline_mode = #tpu.pipeline_mode<synchronous>, transform_indices = @transform_3, window_bounds = array<i64: 8, 1>}, {pipeline_mode = #tpu.pipeline_mode<synchronous>, transform_indices = @transform_4, window_bounds = array<i64: 8, 72>}, {pipeline_mode = #tpu.pipeline_mode<synchronous>, transform_indices = @transform_5, window_bounds = array<i64: 8, 1>}, {pipeline_mode = #tpu.pipeline_mode<synchronous>, transform_indices = @transform_6, window_bounds = array<i64: 8, 4>}, {pipeline_mode = #tpu.pipeline_mode<synchronous>, transform_indices = @transform_7, window_bounds = array<i64: 8, 1>}, {transform_indices = @transform_8, window_bounds = array<i64: 1, 8, 256>}]} {
    %0 = tpu.iota {dimensions = array<i32: 1>} : vector<1x256xi32>
    %c16_i32 = arith.constant 16 : i32
    %c0_i32 = arith.constant 0 : i32
    %1 = arith.cmpi eq, %c16_i32, %c0_i32 : i32
    %c1_i32 = arith.constant 1 : i32
    %2 = arith.select %1, %c1_i32, %c16_i32 : i32
    %3 = vector.broadcast %2 : i32 to vector<1x256xi32>
    %4 = arith.remsi %0, %3 : vector<1x256xi32>
    %c0_i32_0 = arith.constant 0 : i32
    %5 = vector.broadcast %c0_i32_0 : i32 to vector<1x256xi32>
    %6 = arith.cmpi ne, %4, %5 : vector<1x256xi32>
    %c0_i32_1 = arith.constant 0 : i32
    %7 = vector.broadcast %c0_i32_1 : i32 to vector<1x256xi32>
    %8 = arith.cmpi slt, %4, %7 : vector<1x256xi32>
    %c0_i32_2 = arith.constant 0 : i32
    %9 = arith.cmpi slt, %2, %c0_i32_2 : i32
    %10 = vector.broadcast %9 : i1 to vector<1x256xi1>
    %11 = vector.broadcast %10 : vector<1x256xi1> to vector<1x256xi1>
    %12 = arith.xori %8, %11 : vector<1x256xi1>
    %13 = arith.andi %12, %6 : vector<1x256xi1>
    %14 = vector.broadcast %2 : i32 to vector<1x256xi32>
    %15 = arith.addi %4, %14 : vector<1x256xi32>
    %16 = arith.select %13, %15, %4 : vector<1x256xi1>, vector<1x256xi32>
    %c1_i32_3 = arith.constant 1 : i32
    %17 = vector.broadcast %c1_i32_3 : i32 to vector<1x256xi32>
    %18 = arith.cmpi sge, %16, %17 : vector<1x256xi32>
    %cst = arith.constant 1.000000e+00 : f32
    %cst_4 = arith.constant 0.000000e+00 : f32
    %19 = vector.broadcast %cst : f32 to vector<1x256xf32>
    %20 = vector.broadcast %cst_4 : f32 to vector<1x256xf32>
    %21 = arith.select %18, %19, %20 : vector<1x256xi1>, vector<1x256xf32>
    %22 = arith.truncf %21 : vector<1x256xf32> to vector<1x256xbf16>
    %c14_i32 = arith.constant 14 : i32
    %23 = vector.broadcast %c14_i32 : i32 to vector<1x256xi32>
    %24 = arith.cmpi sle, %16, %23 : vector<1x256xi32>
    %cst_5 = arith.constant 1.000000e+00 : f32
    %cst_6 = arith.constant 0.000000e+00 : f32
    %25 = vector.broadcast %cst_5 : f32 to vector<1x256xf32>
    %26 = vector.broadcast %cst_6 : f32 to vector<1x256xf32>
    %27 = arith.select %24, %25, %26 : vector<1x256xi1>, vector<1x256xf32>
    %28 = arith.truncf %27 : vector<1x256xf32> to vector<1x256xbf16>
    %c0 = arith.constant 0 : index
    %c0_7 = arith.constant 0 : index
    %29 = vector.load %arg3[%c0, %c0_7] : memref<8x36xbf16, #tpu.memory_space<vmem>>, vector<8x36xbf16>
    %c0_8 = arith.constant 0 : index
    %c0_9 = arith.constant 0 : index
    %30 = vector.load %arg5[%c0_8, %c0_9] : memref<8x72xbf16, #tpu.memory_space<vmem>>, vector<8x72xbf16>
    %c0_10 = arith.constant 0 : index
    %c0_11 = arith.constant 0 : index
    %31 = vector.load %arg4[%c0_10, %c0_11] : memref<8x1xf32, #tpu.memory_space<vmem>>, vector<8x1xf32>
    %c0_12 = arith.constant 0 : index
    %c0_13 = arith.constant 0 : index
    %32 = vector.load %arg6[%c0_12, %c0_13] : memref<8x1xf32, #tpu.memory_space<vmem>>, vector<8x1xf32>
    %c0_14 = arith.constant 0 : index
    %c0_15 = arith.constant 0 : index
    %c0_16 = arith.constant 0 : index
    %33 = vector.load %arg2[%c0_14, %c0_15, %c0_16] : memref<1x8x1xf32, #tpu.memory_space<vmem>>, vector<1x8x1xf32>
    %34 = vector.shape_cast %33 : vector<1x8x1xf32> to vector<8x1xf32>
    %cst_17 = arith.constant 0.000000e+00 : bf16
    %35 = vector.broadcast %cst_17 : bf16 to vector<4x17xbf16>
    %c0_18 = arith.constant 0 : index
    %c0_19 = arith.constant 0 : index
    %36 = vector.load %arg10[%c0_18, %c0_19] : memref<4x290xbf16, #tpu.memory_space<vmem>>, vector<4x17xbf16>
    tpu.vector_store %arg10[%c0_18, %c0_19], %35 {strides = array<i32>} : memref<4x290xbf16, #tpu.memory_space<vmem>>, vector<4x17xbf16>,
    %cst_20 = arith.constant 0.000000e+00 : bf16
    %37 = vector.broadcast %cst_20 : bf16 to vector<4x17xbf16>
    %c0_21 = arith.constant 0 : index
    %c273 = arith.constant 273 : index
    %38 = vector.load %arg10[%c0_21, %c273] : memref<4x290xbf16, #tpu.memory_space<vmem>>, vector<4x17xbf16>
    tpu.vector_store %arg10[%c0_21, %c273], %37 {strides = array<i32>} : memref<4x290xbf16, #tpu.memory_space<vmem>>, vector<4x17xbf16>,
    %c0_22 = arith.constant 0 : index
    %c0_23 = arith.constant 0 : index
    %c0_24 = arith.constant 0 : index
    %39 = vector.load %arg1[%c0_22, %c0_23, %c0_24] : memref<1x4x256xf32, #tpu.memory_space<vmem>>, vector<1x4x256xf32>
    %40 = vector.shape_cast %39 : vector<1x4x256xf32> to vector<4x256xf32>
    %41 = arith.truncf %40 : vector<4x256xf32> to vector<4x256xbf16>
    %c0_25 = arith.constant 0 : index
    %c17 = arith.constant 17 : index
    %42 = vector.load %arg10[%c0_25, %c17] : memref<4x290xbf16, #tpu.memory_space<vmem>>, vector<4x256xbf16>
    tpu.vector_store %arg10[%c0_25, %c17], %41 {strides = array<i32>} : memref<4x290xbf16, #tpu.memory_space<vmem>>, vector<4x256xbf16>,
    %c0_26 = arith.constant 0 : index
    %c0_27 = arith.constant 0 : index
    %43 = vector.load %arg10[%c0_26, %c0_27] : memref<4x290xbf16, #tpu.memory_space<vmem>>, vector<4x256xbf16>
    %44 = vector.broadcast %22 : vector<1x256xbf16> to vector<4x256xbf16>
    %45 = arith.mulf %43, %44 : vector<4x256xbf16>
    %c0_28 = arith.constant 0 : index
    %c0_29 = arith.constant 0 : index
    %46 = vector.load %arg12[%c0_28, %c0_29] : memref<36x256xbf16, #tpu.memory_space<vmem>>, vector<4x256xbf16>
    tpu.vector_store %arg12[%c0_28, %c0_29], %45 {strides = array<i32>} : memref<36x256xbf16, #tpu.memory_space<vmem>>, vector<4x256xbf16>,
    %c0_30 = arith.constant 0 : index
    %c1 = arith.constant 1 : index
    %47 = vector.load %arg10[%c0_30, %c1] : memref<4x290xbf16, #tpu.memory_space<vmem>>, vector<4x256xbf16>
    %c4 = arith.constant 4 : index
    %c0_31 = arith.constant 0 : index
    %48 = vector.load %arg12[%c4, %c0_31] : memref<36x256xbf16, #tpu.memory_space<vmem>>, vector<4x256xbf16>
    tpu.vector_store %arg12[%c4, %c0_31], %47 {strides = array<i32>} : memref<36x256xbf16, #tpu.memory_space<vmem>>, vector<4x256xbf16>,
    %c0_32 = arith.constant 0 : index
    %c2 = arith.constant 2 : index
    %49 = vector.load %arg10[%c0_32, %c2] : memref<4x290xbf16, #tpu.memory_space<vmem>>, vector<4x256xbf16>
    %50 = vector.broadcast %28 : vector<1x256xbf16> to vector<4x256xbf16>
    %51 = arith.mulf %49, %50 : vector<4x256xbf16>
    %c8 = arith.constant 8 : index
    %c0_33 = arith.constant 0 : index
    %52 = vector.load %arg12[%c8, %c0_33] : memref<36x256xbf16, #tpu.memory_space<vmem>>, vector<4x256xbf16>
    tpu.vector_store %arg12[%c8, %c0_33], %51 {strides = array<i32>} : memref<36x256xbf16, #tpu.memory_space<vmem>>, vector<4x256xbf16>,
    %c0_34 = arith.constant 0 : index
    %c16 = arith.constant 16 : index
    %53 = vector.load %arg10[%c0_34, %c16] : memref<4x290xbf16, #tpu.memory_space<vmem>>, vector<4x256xbf16>
    %54 = vector.broadcast %22 : vector<1x256xbf16> to vector<4x256xbf16>
    %55 = arith.mulf %53, %54 : vector<4x256xbf16>
    %c12 = arith.constant 12 : index
    %c0_35 = arith.constant 0 : index
    %56 = vector.load %arg12[%c12, %c0_35] : memref<36x256xbf16, #tpu.memory_space<vmem>>, vector<4x256xbf16>
    tpu.vector_store %arg12[%c12, %c0_35], %55 {strides = array<i32>} : memref<36x256xbf16, #tpu.memory_space<vmem>>, vector<4x256xbf16>,
    %c0_36 = arith.constant 0 : index
    %c17_37 = arith.constant 17 : index
    %57 = vector.load %arg10[%c0_36, %c17_37] : memref<4x290xbf16, #tpu.memory_space<vmem>>, vector<4x256xbf16>
    %c16_38 = arith.constant 16 : index
    %c0_39 = arith.constant 0 : index
    %58 = vector.load %arg12[%c16_38, %c0_39] : memref<36x256xbf16, #tpu.memory_space<vmem>>, vector<4x256xbf16>
    tpu.vector_store %arg12[%c16_38, %c0_39], %57 {strides = array<i32>} : memref<36x256xbf16, #tpu.memory_space<vmem>>, vector<4x256xbf16>,
    %c0_40 = arith.constant 0 : index
    %c18 = arith.constant 18 : index
    %59 = vector.load %arg10[%c0_40, %c18] : memref<4x290xbf16, #tpu.memory_space<vmem>>, vector<4x256xbf16>
    %60 = vector.broadcast %28 : vector<1x256xbf16> to vector<4x256xbf16>
    %61 = arith.mulf %59, %60 : vector<4x256xbf16>
    %c20 = arith.constant 20 : index
    %c0_41 = arith.constant 0 : index
    %62 = vector.load %arg12[%c20, %c0_41] : memref<36x256xbf16, #tpu.memory_space<vmem>>, vector<4x256xbf16>
    tpu.vector_store %arg12[%c20, %c0_41], %61 {strides = array<i32>} : memref<36x256xbf16, #tpu.memory_space<vmem>>, vector<4x256xbf16>,
    %c0_42 = arith.constant 0 : index
    %c32 = arith.constant 32 : index
    %63 = vector.load %arg10[%c0_42, %c32] : memref<4x290xbf16, #tpu.memory_space<vmem>>, vector<4x256xbf16>
    %64 = vector.broadcast %22 : vector<1x256xbf16> to vector<4x256xbf16>
    %65 = arith.mulf %63, %64 : vector<4x256xbf16>
    %c24 = arith.constant 24 : index
    %c0_43 = arith.constant 0 : index
    %66 = vector.load %arg12[%c24, %c0_43] : memref<36x256xbf16, #tpu.memory_space<vmem>>, vector<4x256xbf16>
    tpu.vector_store %arg12[%c24, %c0_43], %65 {strides = array<i32>} : memref<36x256xbf16, #tpu.memory_space<vmem>>, vector<4x256xbf16>,
    %c0_44 = arith.constant 0 : index
    %c33 = arith.constant 33 : index
    %67 = vector.load %arg10[%c0_44, %c33] : memref<4x290xbf16, #tpu.memory_space<vmem>>, vector<4x256xbf16>
    %c28 = arith.constant 28 : index
    %c0_45 = arith.constant 0 : index
    %68 = vector.load %arg12[%c28, %c0_45] : memref<36x256xbf16, #tpu.memory_space<vmem>>, vector<4x256xbf16>
    tpu.vector_store %arg12[%c28, %c0_45], %67 {strides = array<i32>} : memref<36x256xbf16, #tpu.memory_space<vmem>>, vector<4x256xbf16>,
    %c0_46 = arith.constant 0 : index
    %c34 = arith.constant 34 : index
    %69 = vector.load %arg10[%c0_46, %c34] : memref<4x290xbf16, #tpu.memory_space<vmem>>, vector<4x256xbf16>
    %70 = vector.broadcast %28 : vector<1x256xbf16> to vector<4x256xbf16>
    %71 = arith.mulf %69, %70 : vector<4x256xbf16>
    %c32_47 = arith.constant 32 : index
    %c0_48 = arith.constant 0 : index
    %72 = vector.load %arg12[%c32_47, %c0_48] : memref<36x256xbf16, #tpu.memory_space<vmem>>, vector<4x256xbf16>
    tpu.vector_store %arg12[%c32_47, %c0_48], %71 {strides = array<i32>} : memref<36x256xbf16, #tpu.memory_space<vmem>>, vector<4x256xbf16>,
    %c0_49 = arith.constant 0 : index
    %c0_50 = arith.constant 0 : index
    %73 = vector.load %arg12[%c0_49, %c0_50] : memref<36x256xbf16, #tpu.memory_space<vmem>>, vector<36x256xbf16>
    %cst_51 = arith.constant dense<0.000000e+00> : vector<8x256xf32>
    %74 = tpu.matmul %29, %73, %cst_51 {dimension_numbers = #tpu.dot_dimension_numbers<[1], [0], [0], [1], [0, 0, 1, 1], [], []>} : vector<8x36xbf16>, vector<36x256xbf16>, vector<8x256xf32> -> vector<8x256xf32>
    %75 = vector.broadcast %31 : vector<8x1xf32> to vector<8x256xf32>
    %76 = arith.addf %74, %75 : vector<8x256xf32>
    %cst_52 = arith.constant 0.000000e+00 : f32
    %77 = vector.broadcast %cst_52 : f32 to vector<8x256xf32>
    %78 = arith.maximumf %76, %77 : vector<8x256xf32>
    %79 = vector.broadcast %34 : vector<8x1xf32> to vector<8x256xf32>
    %80 = arith.addf %78, %79 : vector<8x256xf32>
    %cst_53 = arith.constant 0.000000e+00 : bf16
    %81 = vector.broadcast %cst_53 : bf16 to vector<8x17xbf16>
    %c0_54 = arith.constant 0 : index
    %c0_55 = arith.constant 0 : index
    %82 = vector.load %arg11[%c0_54, %c0_55] : memref<8x290xbf16, #tpu.memory_space<vmem>>, vector<8x17xbf16>
    tpu.vector_store %arg11[%c0_54, %c0_55], %81 {strides = array<i32>} : memref<8x290xbf16, #tpu.memory_space<vmem>>, vector<8x17xbf16>,
    %cst_56 = arith.constant 0.000000e+00 : bf16
    %83 = vector.broadcast %cst_56 : bf16 to vector<8x17xbf16>
    %c0_57 = arith.constant 0 : index
    %c273_58 = arith.constant 273 : index
    %84 = vector.load %arg11[%c0_57, %c273_58] : memref<8x290xbf16, #tpu.memory_space<vmem>>, vector<8x17xbf16>
    tpu.vector_store %arg11[%c0_57, %c273_58], %83 {strides = array<i32>} : memref<8x290xbf16, #tpu.memory_space<vmem>>, vector<8x17xbf16>,
    %85 = arith.truncf %80 : vector<8x256xf32> to vector<8x256xbf16>
    %c0_59 = arith.constant 0 : index
    %c17_60 = arith.constant 17 : index
    %86 = vector.load %arg11[%c0_59, %c17_60] : memref<8x290xbf16, #tpu.memory_space<vmem>>, vector<8x256xbf16>
    tpu.vector_store %arg11[%c0_59, %c17_60], %85 {strides = array<i32>} : memref<8x290xbf16, #tpu.memory_space<vmem>>, vector<8x256xbf16>,
    %c0_61 = arith.constant 0 : index
    %c0_62 = arith.constant 0 : index
    %87 = vector.load %arg11[%c0_61, %c0_62] : memref<8x290xbf16, #tpu.memory_space<vmem>>, vector<8x256xbf16>
    %88 = vector.broadcast %22 : vector<1x256xbf16> to vector<8x256xbf16>
    %89 = arith.mulf %87, %88 : vector<8x256xbf16>
    %c0_63 = arith.constant 0 : index
    %c0_64 = arith.constant 0 : index
    %90 = vector.load %arg13[%c0_63, %c0_64] : memref<72x256xbf16, #tpu.memory_space<vmem>>, vector<8x256xbf16>
    tpu.vector_store %arg13[%c0_63, %c0_64], %89 {strides = array<i32>} : memref<72x256xbf16, #tpu.memory_space<vmem>>, vector<8x256xbf16>,
    %c0_65 = arith.constant 0 : index
    %c1_66 = arith.constant 1 : index
    %91 = vector.load %arg11[%c0_65, %c1_66] : memref<8x290xbf16, #tpu.memory_space<vmem>>, vector<8x256xbf16>
    %c8_67 = arith.constant 8 : index
    %c0_68 = arith.constant 0 : index
    %92 = vector.load %arg13[%c8_67, %c0_68] : memref<72x256xbf16, #tpu.memory_space<vmem>>, vector<8x256xbf16>
    tpu.vector_store %arg13[%c8_67, %c0_68], %91 {strides = array<i32>} : memref<72x256xbf16, #tpu.memory_space<vmem>>, vector<8x256xbf16>,
    %c0_69 = arith.constant 0 : index
    %c2_70 = arith.constant 2 : index
    %93 = vector.load %arg11[%c0_69, %c2_70] : memref<8x290xbf16, #tpu.memory_space<vmem>>, vector<8x256xbf16>
    %94 = vector.broadcast %28 : vector<1x256xbf16> to vector<8x256xbf16>
    %95 = arith.mulf %93, %94 : vector<8x256xbf16>
    %c16_71 = arith.constant 16 : index
    %c0_72 = arith.constant 0 : index
    %96 = vector.load %arg13[%c16_71, %c0_72] : memref<72x256xbf16, #tpu.memory_space<vmem>>, vector<8x256xbf16>
    tpu.vector_store %arg13[%c16_71, %c0_72], %95 {strides = array<i32>} : memref<72x256xbf16, #tpu.memory_space<vmem>>, vector<8x256xbf16>,
    %c0_73 = arith.constant 0 : index
    %c16_74 = arith.constant 16 : index
    %97 = vector.load %arg11[%c0_73, %c16_74] : memref<8x290xbf16, #tpu.memory_space<vmem>>, vector<8x256xbf16>
    %98 = vector.broadcast %22 : vector<1x256xbf16> to vector<8x256xbf16>
    %99 = arith.mulf %97, %98 : vector<8x256xbf16>
    %c24_75 = arith.constant 24 : index
    %c0_76 = arith.constant 0 : index
    %100 = vector.load %arg13[%c24_75, %c0_76] : memref<72x256xbf16, #tpu.memory_space<vmem>>, vector<8x256xbf16>
    tpu.vector_store %arg13[%c24_75, %c0_76], %99 {strides = array<i32>} : memref<72x256xbf16, #tpu.memory_space<vmem>>, vector<8x256xbf16>,
    %c0_77 = arith.constant 0 : index
    %c17_78 = arith.constant 17 : index
    %101 = vector.load %arg11[%c0_77, %c17_78] : memref<8x290xbf16, #tpu.memory_space<vmem>>, vector<8x256xbf16>
    %c32_79 = arith.constant 32 : index
    %c0_80 = arith.constant 0 : index
    %102 = vector.load %arg13[%c32_79, %c0_80] : memref<72x256xbf16, #tpu.memory_space<vmem>>, vector<8x256xbf16>
    tpu.vector_store %arg13[%c32_79, %c0_80], %101 {strides = array<i32>} : memref<72x256xbf16, #tpu.memory_space<vmem>>, vector<8x256xbf16>,
    %c0_81 = arith.constant 0 : index
    %c18_82 = arith.constant 18 : index
    %103 = vector.load %arg11[%c0_81, %c18_82] : memref<8x290xbf16, #tpu.memory_space<vmem>>, vector<8x256xbf16>
    %104 = vector.broadcast %28 : vector<1x256xbf16> to vector<8x256xbf16>
    %105 = arith.mulf %103, %104 : vector<8x256xbf16>
    %c40 = arith.constant 40 : index
    %c0_83 = arith.constant 0 : index
    %106 = vector.load %arg13[%c40, %c0_83] : memref<72x256xbf16, #tpu.memory_space<vmem>>, vector<8x256xbf16>
    tpu.vector_store %arg13[%c40, %c0_83], %105 {strides = array<i32>} : memref<72x256xbf16, #tpu.memory_space<vmem>>, vector<8x256xbf16>,
    %c0_84 = arith.constant 0 : index
    %c32_85 = arith.constant 32 : index
    %107 = vector.load %arg11[%c0_84, %c32_85] : memref<8x290xbf16, #tpu.memory_space<vmem>>, vector<8x256xbf16>
    %108 = vector.broadcast %22 : vector<1x256xbf16> to vector<8x256xbf16>
    %109 = arith.mulf %107, %108 : vector<8x256xbf16>
    %c48 = arith.constant 48 : index
    %c0_86 = arith.constant 0 : index
    %110 = vector.load %arg13[%c48, %c0_86] : memref<72x256xbf16, #tpu.memory_space<vmem>>, vector<8x256xbf16>
    tpu.vector_store %arg13[%c48, %c0_86], %109 {strides = array<i32>} : memref<72x256xbf16, #tpu.memory_space<vmem>>, vector<8x256xbf16>,
    %c0_87 = arith.constant 0 : index
    %c33_88 = arith.constant 33 : index
    %111 = vector.load %arg11[%c0_87, %c33_88] : memref<8x290xbf16, #tpu.memory_space<vmem>>, vector<8x256xbf16>
    %c56 = arith.constant 56 : index
    %c0_89 = arith.constant 0 : index
    %112 = vector.load %arg13[%c56, %c0_89] : memref<72x256xbf16, #tpu.memory_space<vmem>>, vector<8x256xbf16>
    tpu.vector_store %arg13[%c56, %c0_89], %111 {strides = array<i32>} : memref<72x256xbf16, #tpu.memory_space<vmem>>, vector<8x256xbf16>,
    %c0_90 = arith.constant 0 : index
    %c34_91 = arith.constant 34 : index
    %113 = vector.load %arg11[%c0_90, %c34_91] : memref<8x290xbf16, #tpu.memory_space<vmem>>, vector<8x256xbf16>
    %114 = vector.broadcast %28 : vector<1x256xbf16> to vector<8x256xbf16>
    %115 = arith.mulf %113, %114 : vector<8x256xbf16>
    %c64 = arith.constant 64 : index
    %c0_92 = arith.constant 0 : index
    %116 = vector.load %arg13[%c64, %c0_92] : memref<72x256xbf16, #tpu.memory_space<vmem>>, vector<8x256xbf16>
    tpu.vector_store %arg13[%c64, %c0_92], %115 {strides = array<i32>} : memref<72x256xbf16, #tpu.memory_space<vmem>>, vector<8x256xbf16>,
    %c0_93 = arith.constant 0 : index
    %c0_94 = arith.constant 0 : index
    %117 = vector.load %arg13[%c0_93, %c0_94] : memref<72x256xbf16, #tpu.memory_space<vmem>>, vector<72x256xbf16>
    %cst_95 = arith.constant dense<0.000000e+00> : vector<8x256xf32>
    %118 = tpu.matmul %30, %117, %cst_95 {dimension_numbers = #tpu.dot_dimension_numbers<[1], [0], [0], [1], [0, 0, 1, 1], [], []>} : vector<8x72xbf16>, vector<72x256xbf16>, vector<8x256xf32> -> vector<8x256xf32>
    %119 = vector.broadcast %32 : vector<8x1xf32> to vector<8x256xf32>
    %120 = arith.addf %118, %119 : vector<8x256xf32>
    %cst_96 = arith.constant 0.000000e+00 : f32
    %121 = vector.broadcast %cst_96 : f32 to vector<8x256xf32>
    %122 = arith.maximumf %120, %121 : vector<8x256xf32>
    %c0_97 = arith.constant 0 : index
    %c0_98 = arith.constant 0 : index
    %123 = vector.load %arg7[%c0_97, %c0_98] : memref<8x4xbf16, #tpu.memory_space<vmem>>, vector<8x4xbf16>
    %c0_99 = arith.constant 0 : index
    %c17_100 = arith.constant 17 : index
    %124 = vector.load %arg10[%c0_99, %c17_100] : memref<4x290xbf16, #tpu.memory_space<vmem>>, vector<4x256xbf16>
    %cst_101 = arith.constant dense<0.000000e+00> : vector<8x256xf32>
    %125 = tpu.matmul %123, %124, %cst_101 {dimension_numbers = #tpu.dot_dimension_numbers<[1], [0], [0], [1], [0, 0, 1, 1], [], []>} : vector<8x4xbf16>, vector<4x256xbf16>, vector<8x256xf32> -> vector<8x256xf32>
    %c0_102 = arith.constant 0 : index
    %c0_103 = arith.constant 0 : index
    %126 = vector.load %arg8[%c0_102, %c0_103] : memref<8x1xf32, #tpu.memory_space<vmem>>, vector<8x1xf32>
    %127 = vector.broadcast %126 : vector<8x1xf32> to vector<8x256xf32>
    %128 = arith.addf %125, %127 : vector<8x256xf32>
    %129 = arith.addf %122, %128 : vector<8x256xf32>
    %c0_104 = arith.constant 0 : index
    %c0_105 = arith.constant 0 : index
    %c0_106 = arith.constant 0 : index
    %130 = vector.load %arg9[%c0_104, %c0_105, %c0_106] : memref<1x8x256xf32, #tpu.memory_space<vmem>>, vector<1x8x256xf32>
    %131 = vector.shape_cast %130 : vector<1x8x256xf32> to vector<8x256xf32>
    %132 = vector.shape_cast %129 : vector<8x256xf32> to vector<1x8x256xf32>
    tpu.vector_store %arg9[%c0_104, %c0_105, %c0_106], %132 {strides = array<i32>} : memref<1x8x256xf32, #tpu.memory_space<vmem>>, vector<1x8x256xf32>,
    return
  }
  func.func @transform_0(%arg0: i32) -> (i32, i32, i32) {
    %c0_i32 = arith.constant 0 : i32
    %c0_i32_0 = arith.constant 0 : i32
    %c0_i32_1 = arith.constant 0 : i32
    return %arg0, %c0_i32, %c0_i32_0 : i32, i32, i32
  }
  func.func @transform_1(%arg0: i32) -> (i32, i32, i32) {
    %c0_i32 = arith.constant 0 : i32
    %c0_i32_0 = arith.constant 0 : i32
    %c0_i32_1 = arith.constant 0 : i32
    return %arg0, %c0_i32, %c0_i32_0 : i32, i32, i32
  }
  func.func @transform_2(%arg0: i32) -> (i32, i32) {
    %c0_i32 = arith.constant 0 : i32
    %c0_i32_0 = arith.constant 0 : i32
    %c0_i32_1 = arith.constant 0 : i32
    return %c0_i32, %c0_i32_0 : i32, i32
  }
  func.func @transform_3(%arg0: i32) -> (i32, i32) {
    %c0_i32 = arith.constant 0 : i32
    %c0_i32_0 = arith.constant 0 : i32
    %c0_i32_1 = arith.constant 0 : i32
    return %c0_i32, %c0_i32_0 : i32, i32
  }
  func.func @transform_4(%arg0: i32) -> (i32, i32) {
    %c0_i32 = arith.constant 0 : i32
    %c0_i32_0 = arith.constant 0 : i32
    %c0_i32_1 = arith.constant 0 : i32
    return %c0_i32, %c0_i32_0 : i32, i32
  }
  func.func @transform_5(%arg0: i32) -> (i32, i32) {
    %c0_i32 = arith.constant 0 : i32
    %c0_i32_0 = arith.constant 0 : i32
    %c0_i32_1 = arith.constant 0 : i32
    return %c0_i32, %c0_i32_0 : i32, i32
  }
  func.func @transform_6(%arg0: i32) -> (i32, i32) {
    %c0_i32 = arith.constant 0 : i32
    %c0_i32_0 = arith.constant 0 : i32
    %c0_i32_1 = arith.constant 0 : i32
    return %c0_i32, %c0_i32_0 : i32, i32
  }
  func.func @transform_7(%arg0: i32) -> (i32, i32) {
    %c0_i32 = arith.constant 0 : i32
    %c0_i32_0 = arith.constant 0 : i32
    %c0_i32_1 = arith.constant 0 : i32
    return %c0_i32, %c0_i32_0 : i32, i32
  }
  func.func @transform_8(%arg0: i32) -> (i32, i32, i32) {
    %c0_i32 = arith.constant 0 : i32
    %c0_i32_0 = arith.constant 0 : i32
    %c0_i32_1 = arith.constant 0 : i32
    return %arg0, %c0_i32, %c0_i32_0 : i32, i32, i32
  }
}

</mosaic_0001>

<llo_original>
// kernel: block_forward.1
$region0: #{block_forward.1}
  #allocation0 [shape = 'u32[]', space=smem, size = 0x4, offset = 0x4, fixed_abs, tag = 'smem constant byte address 0x4 - core index']
  #allocation1 [shape = 'u32[144,128]{1,0:T(1,128)}', space=vmem, size = 0x12000, scoped, tag = 'internal scratch']
  #allocation2 [shape = 'bf16[4,290]{1,0:T(4,128)(2,1)}', space=vmem, size = 0xc00, scoped, tag = 'scratch operand']
  #allocation3 [shape = 'bf16[8,290]{1,0:T(8,128)(2,1)}', space=vmem, size = 0x1800, scoped, tag = 'scratch operand']
  #allocation4 [shape = 'bf16[36,256]{1,0:T(8,128)(2,1)}', space=vmem, size = 0x5000, scoped, tag = 'scratch operand']
  #allocation5 [shape = 'bf16[72,256]{1,0:T(8,128)(2,1)}', space=vmem, size = 0x9000, scoped, tag = 'scratch operand']
  %s0 = inlined_call_operand.vmem [shape: f32[2,4,256], index: 0, kind: input, shape index: {}]
  %s1 = inlined_call_operand.vmem [shape: f32[2,8,1], index: 1, kind: input, shape index: {}]
  %s2 = inlined_call_operand.vmem [shape: bf16[8,36], index: 2, kind: input, shape index: {}]
  %s3 = inlined_call_operand.vmem [shape: f32[8,1], index: 3, kind: input, shape index: {}]
  %s4 = inlined_call_operand.vmem [shape: bf16[8,72], index: 4, kind: input, shape index: {}]
  %s5 = inlined_call_operand.vmem [shape: f32[8,1], index: 5, kind: input, shape index: {}]
  %s6 = inlined_call_operand.vmem [shape: bf16[8,4], index: 6, kind: input, shape index: {}]
  %s7 = inlined_call_operand.vmem [shape: f32[8,1], index: 7, kind: input, shape index: {}]
  %s8 = inlined_call_operand.vmem [shape: f32[2,8,256], index: 8, kind: output, shape index: {}]
  %s9 = sld [smem:[#allocation0]]
  $region65: #{block_forward.1} parent=0
    _
  %s11 = ssub.s32 1, %s9
  %s12 = scalar_select 0, %s11, %s9
  loop: start=0, step=1, limit=4
  $region2: #{block_forward.1} parent=0 // loop_pre_header
    _
  $region3: #{block_forward.1} parent=0 // loop_header
    %s14 = sphi 0, %s18
    %p15 = scmp.ge.s32.totalorder %s14, 4
    %s24 = sphi 0, %s26
    %s27 = sphi 0, %s24
    %s28 = sphi 0, %s27
    %s44 = sphi 0, %s28
    %s50 = sphi 0, %s52
    %s53 = sphi 0, %s50
    %s54 = sphi 0, %s53
    %s70 = sphi 0, %s54
    %s74 = sphi 0, %s74
    %s76 = sphi 0, %s74
    %s77 = sphi 0, %s76
    %s91 = sphi 0, %s77
    %s95 = sphi 0, %s95
    %s97 = sphi 0, %s95
    %s98 = sphi 0, %s97
    %s112 = sphi 0, %s98
    %s116 = sphi 0, %s116
    %s118 = sphi 0, %s116
    %s119 = sphi 0, %s118
    %s133 = sphi 0, %s119
    %s137 = sphi 0, %s137
    %s139 = sphi 0, %s137
    %s140 = sphi 0, %s139
    %s154 = sphi 0, %s140
    %s158 = sphi 0, %s158
    %s160 = sphi 0, %s158
    %s161 = sphi 0, %s160
    %s175 = sphi 0, %s161
    %s179 = sphi 0, %s179
    %s181 = sphi 0, %s179
    %s182 = sphi 0, %s181
    %s196 = sphi 0, %s182
    %s202 = sphi 0, %s204
    %s205 = sphi 0, %s202
    %s206 = sphi 0, %s205
    %s222 = sphi 0, %s206
  $region4: #{block_forward.1} parent=0 // loop_header_branch
    %17 = sbr.rel (%p15) target = $region8
  $region5: #{block_forward.1} parent=0 // loop_body
    %s19 = ssub.s32 %s14, 1
    %s20 = ssub.s32 %s14, 2
    %s21 = sadd.s32 %s14, 1
    %s22 = ssub.s32 %s14, %s21
    %p23 = scmp.eq.s32.totalorder %s22, 0
    %s25 = sadd.s32 %s24, 1
    %s26 = scalar_select %p23, %s24, %s25
    %p29 = pneg %p23
    %p30 = scmp.eq.s32.totalorder %s14, 1
    %p31 = por %p29, %p30
    %p32 = scmp.ne.s32.totalorder %s24, %s27
    %p33 = scmp.eq.s32.totalorder %s14, 0
    %p34 = por %p32, %p33
    %p35 = scmp.ne.s32.totalorder %s24, %s27
    %p36 = scmp.eq.s32.totalorder %s19, 1
    %p37 = por %p35, %p36
    %p38 = scmp.ne.s32.totalorder %s27, %s28
    %p39 = scmp.eq.s32.totalorder %s19, 0
    %p40 = por %p38, %p39
    %p41 = scmp.ne.s32.totalorder %s27, %s28
    %p42 = scmp.eq.s32.totalorder %s20, 1
    %p43 = por %p41, %p42
    %p45 = scmp.ne.s32.totalorder %s28, %s44
    %p46 = scmp.eq.s32.totalorder %s20, 0
    %p47 = por %p45, %p46
    %s48 = ssub.s32 %s14, %s21
    %p49 = scmp.eq.s32.totalorder %s48, 0
    %s51 = sadd.s32 %s50, 1
    %s52 = scalar_select %p49, %s50, %s51
    %p55 = pneg %p49
    %p56 = scmp.eq.s32.totalorder %s14, 1
    %p57 = por %p55, %p56
    %p58 = scmp.ne.s32.totalorder %s50, %s53
    %p59 = scmp.eq.s32.totalorder %s14, 0
    %p60 = por %p58, %p59
    %p61 = scmp.ne.s32.totalorder %s50, %s53
    %p62 = scmp.eq.s32.totalorder %s19, 1
    %p63 = por %p61, %p62
    %p64 = scmp.ne.s32.totalorder %s53, %s54
    %p65 = scmp.eq.s32.totalorder %s19, 0
    %p66 = por %p64, %p65
    %p67 = scmp.ne.s32.totalorder %s53, %s54
    %p68 = scmp.eq.s32.totalorder %s20, 1
    %p69 = por %p67, %p68
    %p71 = scmp.ne.s32.totalorder %s54, %s70
    %p72 = scmp.eq.s32.totalorder %s20, 0
    %p73 = por %p71, %p72
    %s75 = sadd.s32 %s74, 1
    %p78 = scmp.eq.s32.totalorder %s14, 1
    %p79 = scmp.ne.s32.totalorder %s74, %s76
    %p80 = scmp.eq.s32.totalorder %s14, 0
    %p81 = por %p79, %p80
    %p82 = scmp.ne.s32.totalorder %s74, %s76
    %p83 = scmp.eq.s32.totalorder %s19, 1
    %p84 = por %p82, %p83
    %p85 = scmp.ne.s32.totalorder %s76, %s77
    %p86 = scmp.eq.s32.totalorder %s19, 0
    %p87 = por %p85, %p86
    %p88 = scmp.ne.s32.totalorder %s76, %s77
    %p89 = scmp.eq.s32.totalorder %s20, 1
    %p90 = por %p88, %p89
    %p92 = scmp.ne.s32.totalorder %s77, %s91
    %p93 = scmp.eq.s32.totalorder %s20, 0
    %p94 = por %p92, %p93
    %s96 = sadd.s32 %s95, 1
    %p99 = scmp.eq.s32.totalorder %s14, 1
    %p100 = scmp.ne.s32.totalorder %s95, %s97
    %p101 = scmp.eq.s32.totalorder %s14, 0
    %p102 = por %p100, %p101
    %p103 = scmp.ne.s32.totalorder %s95, %s97
    %p104 = scmp.eq.s32.totalorder %s19, 1
    %p105 = por %p103, %p104
    %p106 = scmp.ne.s32.totalorder %s97, %s98
    %p107 = scmp.eq.s32.totalorder %s19, 0
    %p108 = por %p106, %p107
    %p109 = scmp.ne.s32.totalorder %s97, %s98
    %p110 = scmp.eq.s32.totalorder %s20, 1
    %p111 = por %p109, %p110
    %p113 = scmp.ne.s32.totalorder %s98, %s112
    %p114 = scmp.eq.s32.totalorder %s20, 0
    %p115 = por %p113, %p114
    %s117 = sadd.s32 %s116, 1
    %p120 = scmp.eq.s32.totalorder %s14, 1
    %p121 = scmp.ne.s32.totalorder %s116, %s118
    %p122 = scmp.eq.s32.totalorder %s14, 0
    %p123 = por %p121, %p122
    %p124 = scmp.ne.s32.totalorder %s116, %s118
    %p125 = scmp.eq.s32.totalorder %s19, 1
    %p126 = por %p124, %p125
    %p127 = scmp.ne.s32.totalorder %s118, %s119
    %p128 = scmp.eq.s32.totalorder %s19, 0
    %p129 = por %p127, %p128
    %p130 = scmp.ne.s32.totalorder %s118, %s119
    %p131 = scmp.eq.s32.totalorder %s20, 1
    %p132 = por %p130, %p131
    %p134 = scmp.ne.s32.totalorder %s119, %s133
    %p135 = scmp.eq.s32.totalorder %s20, 0
    %p136 = por %p134, %p135
    %s138 = sadd.s32 %s137, 1
    %p141 = scmp.eq.s32.totalorder %s14, 1
    %p142 = scmp.ne.s32.totalorder %s137, %s139
    %p143 = scmp.eq.s32.totalorder %s14, 0
    %p144 = por %p142, %p143
    %p145 = scmp.ne.s32.totalorder %s137, %s139
    %p146 = scmp.eq.s32.totalorder %s19, 1
    %p147 = por %p145, %p146
    %p148 = scmp.ne.s32.totalorder %s139, %s140
    %p149 = scmp.eq.s32.totalorder %s19, 0
    %p150 = por %p148, %p149
    %p151 = scmp.ne.s32.totalorder %s139, %s140
    %p152 = scmp.eq.s32.totalorder %s20, 1
    %p153 = por %p151, %p152
    %p155 = scmp.ne.s32.totalorder %s140, %s154
    %p156 = scmp.eq.s32.totalorder %s20, 0
    %p157 = por %p155, %p156
    %s159 = sadd.s32 %s158, 1
    %p162 = scmp.eq.s32.totalorder %s14, 1
    %p163 = scmp.ne.s32.totalorder %s158, %s160
    %p164 = scmp.eq.s32.totalorder %s14, 0
    %p165 = por %p163, %p164
    %p166 = scmp.ne.s32.totalorder %s158, %s160
    %p167 = scmp.eq.s32.totalorder %s19, 1
    %p168 = por %p166, %p167
    %p169 = scmp.ne.s32.totalorder %s160, %s161
    %p170 = scmp.eq.s32.totalorder %s19, 0
    %p171 = por %p169, %p170
    %p172 = scmp.ne.s32.totalorder %s160, %s161
    %p173 = scmp.eq.s32.totalorder %s20, 1
    %p174 = por %p172, %p173
    %p176 = scmp.ne.s32.totalorder %s161, %s175
    %p177 = scmp.eq.s32.totalorder %s20, 0
    %p178 = por %p176, %p177
    %s180 = sadd.s32 %s179, 1
    %p183 = scmp.eq.s32.totalorder %s14, 1
    %p184 = scmp.ne.s32.totalorder %s179, %s181
    %p185 = scmp.eq.s32.totalorder %s14, 0
    %p186 = por %p184, %p185
    %p187 = scmp.ne.s32.totalorder %s179, %s181
    %p188 = scmp.eq.s32.totalorder %s19, 1
    %p189 = por %p187, %p188
    %p190 = scmp.ne.s32.totalorder %s181, %s182
    %p191 = scmp.eq.s32.totalorder %s19, 0
    %p192 = por %p190, %p191
    %p193 = scmp.ne.s32.totalorder %s181, %s182
    %p194 = scmp.eq.s32.totalorder %s20, 1
    %p195 = por %p193, %p194
    %p197 = scmp.ne.s32.totalorder %s182, %s196
    %p198 = scmp.eq.s32.totalorder %s20, 0
    %p199 = por %p197, %p198
    %s200 = ssub.s32 %s14, %s21
    %p201 = scmp.eq.s32.totalorder %s200, 0
    %s203 = sadd.s32 %s202, 1
    %s204 = scalar_select %p201, %s202, %s203
    %p207 = pneg %p201
    %p208 = scmp.eq.s32.totalorder %s14, 1
    %p209 = por %p207, %p208
    %p210 = scmp.ne.s32.totalorder %s202, %s205
    %p211 = scmp.eq.s32.totalorder %s14, 0
    %p212 = por %p210, %p211
    %p213 = scmp.ne.s32.totalorder %s202, %s205
    %p214 = scmp.eq.s32.totalorder %s19, 1
    %p215 = por %p213, %p214
    %p216 = scmp.ne.s32.totalorder %s205, %s206
    %p217 = scmp.eq.s32.totalorder %s19, 0
    %p218 = por %p216, %p217
    %p219 = scmp.ne.s32.totalorder %s205, %s206
    %p220 = scmp.eq.s32.totalorder %s20, 1
    %p221 = por %p219, %p220
    %p223 = scmp.ne.s32.totalorder %s206, %s222
    %p224 = scmp.eq.s32.totalorder %s20, 0
    %p225 = por %p223, %p224
    %p226 = scmp.le.s32.totalorder 1, %s14
    %p227 = scmp.lt.s32.totalorder %s14, 3
    %p228 = pnand %p226, %p227
    %p229 = pneg %p228
    // Predicated region
    $region9: #{block_forward.1} parent=5 // pred_check
      _
    $region10: #{block_forward.1} parent=5 // pred_check_branch
      %231 = sbr.rel (%p228) target = $region12
    $region11: #{block_forward.1} parent=5 // pred_region
      %s232 = ssub.s32 %s14, 1
      // Predicated region
      $region13: #{block_forward.1} parent=11 // pred_check
        %p233 = pneg %p87
      $region14: #{block_forward.1} parent=11 // pred_check_branch
        %235 = sbr.rel (%p233) target = $region16
      $region15: #{block_forward.1} parent=11 // pred_region
        _
      $region16: #{block_forward.1} parent=11 // pred_fallthru
        _
      // Predicated region
      $region17: #{block_forward.1} parent=11 // pred_check
        %p236 = pneg %p108
      $region18: #{block_forward.1} parent=11 // pred_check_branch
        %238 = sbr.rel (%p236) target = $region20
      $region19: #{block_forward.1} parent=11 // pred_region
        _
      $region20: #{block_forward.1} parent=11 // pred_fallthru
        _
      // Predicated region
      $region21: #{block_forward.1} parent=11 // pred_check
        %p239 = pneg %p129
      $region22: #{block_forward.1} parent=11 // pred_check_branch
        %241 = sbr.rel (%p239) target = $region24
      $region23: #{block_forward.1} parent=11 // pred_region
        _
      $region24: #{block_forward.1} parent=11 // pred_fallthru
        _
      // Predicated region
      $region25: #{block_forward.1} parent=11 // pred_check
        %p242 = pneg %p150
      $region26: #{block_forward.1} parent=11 // pred_check_branch
        %244 = sbr.rel (%p242) target = $region28
      $region27: #{block_forward.1} parent=11 // pred_region
        _
      $region28: #{block_forward.1} parent=11 // pred_fallthru
        _
      // Predicated region
      $region29: #{block_forward.1} parent=11 // pred_check
        %p245 = pneg %p171
      $region30: #{block_forward.1} parent=11 // pred_check_branch
        %247 = sbr.rel (%p245) target = $region32
      $region31: #{block_forward.1} parent=11 // pred_region
        _
      $region32: #{block_forward.1} parent=11 // pred_fallthru
        _
      // Predicated region
      $region33: #{block_forward.1} parent=11 // pred_check
        %p248 = pneg %p192
      $region34: #{block_forward.1} parent=11 // pred_check_branch
        %250 = sbr.rel (%p248) target = $region36
      $region35: #{block_forward.1} parent=11 // pred_region
        _
      $region36: #{block_forward.1} parent=11 // pred_fallthru
        _
    $region12: #{block_forward.1} parent=5 // pred_fallthru
      _
    %p251 = scmp.lt.s32.totalorder %s14, 2
    // Predicated region
    $region37: #{block_forward.1} parent=5 // pred_check
      %p252 = pneg %p251
    $region38: #{block_forward.1} parent=5 // pred_check_branch
      %254 = sbr.rel (%p252) target = $region40
    $region39: #{block_forward.1} parent=5 // pred_region
      // Predicated region
      $region41: #{block_forward.1} parent=39 // pred_check
        %p255 = pneg %p34
      $region42: #{block_forward.1} parent=39 // pred_check_branch
        %257 = sbr.rel (%p255) target = $region44
      $region43: #{block_forward.1} parent=39 // pred_region
        %p258 = scmp.lt.s32.totalorder %s14, 1
        %s259 = scalar_select %p258, %s14, 1
        %s260 = smul.addr %s259, 2
        %s261 = smul.addr %s260, 4
        %s262 = scalar_lea.vmem %s0, %s261
      $region44: #{block_forward.1} parent=39 // pred_fallthru
        _
      // Predicated region
      $region45: #{block_forward.1} parent=39 // pred_check
        %p263 = pneg %p60
      $region46: #{block_forward.1} parent=39 // pred_check_branch
        %265 = sbr.rel (%p263) target = $region48
      $region47: #{block_forward.1} parent=39 // pred_region
        %p266 = scmp.lt.s32.totalorder %s14, 1
        %s267 = scalar_select %p266, %s14, 1
        %s268 = smul.addr %s267, 8
        %s269 = scalar_lea.vmem %s1, %s268
      $region48: #{block_forward.1} parent=39 // pred_fallthru
        _
    $region40: #{block_forward.1} parent=5 // pred_fallthru
      _
    %p270 = scmp.le.s32.totalorder 1, %s14
    %p271 = scmp.lt.s32.totalorder %s14, 3
    %p272 = pnand %p270, %p271
    %p273 = pneg %p272
    // Predicated region
    $region49: #{block_forward.1} parent=5 // pred_check
      _
    $region50: #{block_forward.1} parent=5 // pred_check_branch
      %275 = sbr.rel (%p272) target = $region52
    $region51: #{block_forward.1} parent=5 // pred_region
      %s276 = ssub.s32 %s14, 1
      %p277 = scmp.lt.s32.totalorder %s19, 1
      %s278 = scalar_select %p277, %s19, 1
      %s279 = smul.addr %s278, 2
      %s280 = smul.addr %s279, 4
      %s281 = scalar_lea.vmem %s0, %s280
      %p282 = pneg %p40
      %p283 = pneg %p37
      %p284 = scmp.lt.s32.totalorder %s19, 1
      %s285 = scalar_select %p284, %s19, 1
      %s286 = smul.addr %s285, 8
      %s287 = scalar_lea.vmem %s1, %s286
      %p288 = pneg %p66
      %p289 = pneg %p63
      %p290 = pneg %p87
      %p291 = pneg %p84
      %p292 = pneg %p108
      %p293 = pneg %p105
      %p294 = pneg %p129
      %p295 = pneg %p126
      %p296 = pneg %p150
      %p297 = pneg %p147
      %p298 = pneg %p171
      %p299 = pneg %p168
      %p300 = pneg %p192
      %p301 = pneg %p189
      %p302 = pneg %p218
      %p303 = pneg %p215
      %p304 = scmp.lt.s32.totalorder %s19, 1
      %s305 = scalar_select %p304, %s19, 1
      %s306 = smul.addr %s305, 2
      %s307 = smul.addr %s306, 8
      %s308 = scalar_lea.vmem %s8, %s307
      %p309 = scmp.lt.s32.totalorder %s19, 1
      %s310 = scalar_select %p309, %s19, 1
      %s311 = smul.addr %s310, 2
      %s312 = smul.addr %s311, 4
      %s313 = scalar_lea.vmem %s0, %s312
      %p314 = scmp.lt.s32.totalorder %s19, 1
      %s315 = scalar_select %p314, %s19, 1
      %s316 = smul.addr %s315, 8
      %s317 = scalar_lea.vmem %s1, %s316
      %p318 = scmp.lt.s32.totalorder %s19, 1
      %s319 = scalar_select %p318, %s19, 1
      %s320 = smul.addr %s319, 2
      %s321 = smul.addr %s320, 8
      %s322 = scalar_lea.vmem %s8, %s321
      %v324 = vlaneseq
      %v325 = vand.u32 %v324, 127
      %v326 = vadd.s32 %v325, 128
      %vm327 = vcmp.lt.s32.totalorder %v325, 0
      %v328 = vsub.s32 0, %v325
      %v329 = vsel %vm327, %v328, %v325
      %v330 = vshrl.u32 %v329, 4
      %v331 = vand.u32 %v329, 15
      %v332 = vsub.s32 0, %v331
      %v333 = vsel %vm327, %v332, %v331
      %vm334 = vcmp.lt.s32.totalorder %v326, 0
      %v335 = vsub.s32 0, %v326
      %v336 = vsel %vm334, %v335, %v326
      %v337 = vshrl.u32 %v336, 4
      %v338 = vand.u32 %v336, 15
      %v339 = vsub.s32 0, %v338
      %v340 = vsel %vm334, %v339, %v338
      %vm341 = vcmp.ne.s32.totalorder %v333, 0
      %vm342 = vcmp.ne.s32.totalorder %v340, 0
      %vm343 = vcmp.lt.s32.totalorder %v333, 0
      %vm344 = vcmp.lt.s32.totalorder %v340, 0
      %vm345 = vmand %vm343, %vm341
      %vm346 = vmand %vm344, %vm342
      %v347 = vadd.s32 %v333, 16
      %v348 = vadd.s32 %v340, 16
      %v349 = vsel %vm345, %v347, %v333
      %v350 = vsel %vm346, %v348, %v340
      %vm351 = vcmp.ge.s32.totalorder %v349, 1
      %vm352 = vcmp.ge.s32.totalorder %v350, 1
      %v353 = vsel %vm351, 1.0, 0.0
      %v354 = vsel %vm352, 1.0, 0.0
      %v355 = vpack.c.bf16 %v353, %v353
      %v356 = vpack.c.bf16 %v354, %v354
      %vm357 = vcmp.le.s32.totalorder %v349, 14
      %vm358 = vcmp.le.s32.totalorder %v350, 14
      %v359 = vsel %vm357, 1.0, 0.0
      %v360 = vsel %vm358, 1.0, 0.0
      %v361 = vpack.c.bf16 %v359, %v359
      %v362 = vpack.c.bf16 %v360, %v360
      %v363 = vld [vmem:[%s2] sm:$0xf]
      %v364 = vld [vmem:[%s4] sm:$0xf]
      %v365 = vld [vmem:[%s3] sm:$0xff]
      %v366 = vld [vmem:[%s5] sm:$0xff]
      %v367 = vld [vmem:[%s317] sm:$0xff]
      %vm368 = vcmask 132096
      %369 = vst.msk [vmem:[#allocation2] sm:$0x3] %vm368, 0
      %vm370 = vcmask 271496
      %371 = vst.msk [vmem:[#allocation2 + $0x4] sm:$0x3] %vm370, 0
      %v372 = vld [vmem:[%s313] sm:$0xff]
      %v374 = vcombine.high %v372, %v372
      %v376 = vpack.c.bf16 %v372, %v372
      %v377 = vpack.c.bf16 %v374, %v374
      %v380 = vcombine.low %v376, %v377
      %v382 = vunpack.c.l.s4 1983009808
      %v383 = vunpack.c.0.s8 %v382
      %v384 = vlaneseq
      %v385 = vshrl.u32 %v384, 7
      %v386 = vsub.s32 %v383, %v385
      %v387 = vrot.slane %v380, %v386
      %388 = vrot.lane.b32.xlu0 %v387, 17
      %v389 = vpop.permute.xlu0 %388
      %v390 = vrot.slane %v389, 6
      %vm391 = vcmask 138240
      %v392 = vsel %vm391, %v390, %v389
      %vm394 = vcmask 1041544
      %vm395 = vcmask 1043458
      %vm396 = vmor %vm395, %vm394
      %vm397 = vcmask 136196
      %vm398 = vmor %vm397, %vm396
      %399 = vst.msk [vmem:[#allocation2] sm:$0x3f] %vm398, %v392
      %v400 = vld [vmem:[#allocation2] sm:$0xf]
      %v403 = vcombine.low %v355, %v356
      %v405 = vunpack.c.l.s4 1983009808
      %v406 = vunpack.c.0.s8 %v405
      %v407 = vlaneseq
      %v408 = vshrl.u32 %v407, 7
      %v409 = vsub.s32 %v406, %v408
      %v410 = vrot.slane %v403, %v409
      %v412 = vmul.bf16 %v400, %v410
      %v415 = vunpack.c.l.s4 1983009808
      %v416 = vunpack.c.0.s8 %v415
      %v417 = vlaneseq
      %v418 = vshrl.u32 %v417, 7
      %v419 = vsub.s32 %v416, %v418
      %v420 = vrot.slane %v412, %v419
      %422 = vst [vmem:[#allocation4] sm:$0x33] %v420
      %v423 = vld [vmem:[#allocation2] sm:$0x3f]
      %v425 = vcombine.low %v423, %v423
      %v427 = vunpack.c.l.s4 1983009808
      %v428 = vunpack.c.0.s8 %v427
      %v429 = vlaneseq
      %v430 = vshrl.u32 %v429, 7
      %v431 = vsub.s32 %v428, %v430
      %v432 = vrot.slane %v425, %v431
      %v434 = vunpack.c.l.s4 1983009808
      %v435 = vunpack.c.0.s8 %v434
      %v436 = vlaneseq
      %v437 = vshrl.u32 %v436, 7
      %v438 = vsub.s32 %v435, %v437
      %v439 = vrot.slane %v423, %v438
      %440 = vrot.lane.b32.xlu0 %v432, 127
      %v441 = vpop.permute.xlu0 %440
      %442 = vrot.lane.b32.xlu0 %v439, 127
      %v443 = vpop.permute.xlu0 %442
      %v444 = vrot.slane %v441, 4
      %v445 = vrot.slane %v443, 4
      %vm446 = vcmask 1043456
      %v447 = vsel %vm446, %v444, %v445
      %vm448 = vcmask 1039360
      %v449 = vsel %vm448, %v441, %v447
      %451 = vst [vmem:[#allocation4] sm:$0xcc] %v449
      %v452 = vld [vmem:[#allocation2] sm:$0x3f]
      %v455 = vcombine.low %v361, %v362
      %v457 = vunpack.c.l.s4 1983009808
      %v458 = vunpack.c.0.s8 %v457
      %v459 = vlaneseq
      %v460 = vshrl.u32 %v459, 7
      %v461 = vsub.s32 %v458, %v460
      %v462 = vrot.slane %v455, %v461
      %463 = vrot.lane.b32.xlu0 %v462, 2
      %v464 = vpop.permute.xlu0 %463
      %v465 = vrot.slane %v464, 6
      %vm466 = vcmask 15360
      %v467 = vsel %vm466, %v465, %v464
      %v469 = vmul.bf16 %v452, %v467
      %v471 = vcombine.high %v469, %v469
      %v473 = vunpack.c.l.s4 1983009808
      %v474 = vunpack.c.0.s8 %v473
      %v475 = vlaneseq
      %v476 = vshrl.u32 %v475, 7
      %v477 = vsub.s32 %v474, %v476
      %v478 = vrot.slane %v469, %v477
      %v480 = vunpack.c.l.s4 1983009808
      %v481 = vunpack.c.0.s8 %v480
      %v482 = vlaneseq
      %v483 = vshrl.u32 %v482, 7
      %v484 = vsub.s32 %v481, %v483
      %v485 = vrot.slane %v471, %v484
      %486 = vrot.lane.b32.xlu0 %v478, 126
      %v487 = vpop.permute.xlu0 %486
      %488 = vrot.lane.b32.xlu0 %v485, 126
      %v489 = vpop.permute.xlu0 %488
      %v490 = vrot.slane %v487, 4
      %v491 = vrot.slane %v489, 4
      %v492 = vsel %vm446, %v490, %v491
      %vm493 = vcmask 1031168
      %v494 = vsel %vm493, %v487, %v492
      %496 = vst [vmem:[#allocation4 + $0x8] sm:$0x33] %v494
      %v497 = vld [vmem:[#allocation2] sm:$0x3f]
      %498 = vrot.lane.b32.xlu0 %v410, 16
      %v499 = vpop.permute.xlu0 %498
      %v500 = vrot.slane %v499, 6
      %vm501 = vcmask 130048
      %v502 = vsel %vm501, %v500, %v499
      %v504 = vmul.bf16 %v497, %v502
      %v506 = vcombine.low %v504, %v504
      %v508 = vunpack.c.l.s4 1983009808
      %v509 = vunpack.c.0.s8 %v508
      %v510 = vlaneseq
      %v511 = vshrl.u32 %v510, 7
      %v512 = vsub.s32 %v509, %v511
      %v513 = vrot.slane %v506, %v512
      %v515 = vunpack.c.l.s4 1983009808
      %v516 = vunpack.c.0.s8 %v515
      %v517 = vlaneseq
      %v518 = vshrl.u32 %v517, 7
      %v519 = vsub.s32 %v516, %v518
      %v520 = vrot.slane %v504, %v519
      %521 = vrot.lane.b32.xlu0 %v513, 112
      %v522 = vpop.permute.xlu0 %521
      %523 = vrot.lane.b32.xlu0 %v520, 112
      %v524 = vpop.permute.xlu0 %523
      %v525 = vrot.slane %v522, 4
      %v526 = vrot.slane %v524, 4
      %v527 = vsel %vm446, %v525, %v526
      %vm528 = vcmask 916480
      %v529 = vsel %vm528, %v522, %v527
      %531 = vst [vmem:[#allocation4 + $0x8] sm:$0xcc] %v529
      %v532 = vld [vmem:[#allocation2] sm:$0x3f]
      %v534 = vcombine.high %v532, %v532
      %v536 = vunpack.c.l.s4 1983009808
      %v537 = vunpack.c.0.s8 %v536
      %v538 = vlaneseq
      %v539 = vshrl.u32 %v538, 7
      %v540 = vsub.s32 %v537, %v539
      %v541 = vrot.slane %v532, %v540
      %v543 = vunpack.c.l.s4 1983009808
      %v544 = vunpack.c.0.s8 %v543
      %v545 = vlaneseq
      %v546 = vshrl.u32 %v545, 7
      %v547 = vsub.s32 %v544, %v546
      %v548 = vrot.slane %v534, %v547
      %549 = vrot.lane.b32.xlu0 %v541, 111
      %v550 = vpop.permute.xlu0 %549
      %551 = vrot.lane.b32.xlu0 %v548, 111
      %v552 = vpop.permute.xlu0 %551
      %v553 = vrot.slane %v550, 4
      %v554 = vrot.slane %v552, 4
      %v555 = vsel %vm446, %v553, %v554
      %vm556 = vcmask 908288
      %v557 = vsel %vm556, %v550, %v555
      %559 = vst [vmem:[#allocation4 + $0x10] sm:$0x33] %v557
      %v560 = vld [vmem:[#allocation2] sm:$0x3f]
      %561 = vrot.lane.b32.xlu0 %v462, 18
      %v562 = vpop.permute.xlu0 %561
      %v563 = vrot.slane %v562, 6
      %vm564 = vcmask 146432
      %v565 = vsel %vm564, %v563, %v562
      %v567 = vmul.bf16 %v560, %v565
      %v569 = vcombine.low %v567, %v567
      %v571 = vunpack.c.l.s4 1983009808
      %v572 = vunpack.c.0.s8 %v571
      %v573 = vlaneseq
      %v574 = vshrl.u32 %v573, 7
      %v575 = vsub.s32 %v572, %v574
      %v576 = vrot.slane %v569, %v575
      %v578 = vunpack.c.l.s4 1983009808
      %v579 = vunpack.c.0.s8 %v578
      %v580 = vlaneseq
      %v581 = vshrl.u32 %v580, 7
      %v582 = vsub.s32 %v579, %v581
      %v583 = vrot.slane %v567, %v582
      %584 = vrot.lane.b32.xlu0 %v576, 110
      %v585 = vpop.permute.xlu0 %584
      %586 = vrot.lane.b32.xlu0 %v583, 110
      %v587 = vpop.permute.xlu0 %586
      %v588 = vrot.slane %v585, 4
      %v589 = vrot.slane %v587, 4
      %v590 = vsel %vm446, %v588, %v589
      %vm591 = vcmask 900096
      %v592 = vsel %vm591, %v585, %v590
      %594 = vst [vmem:[#allocation4 + $0x10] sm:$0xcc] %v592
      %v595 = vld [vmem:[#allocation2] sm:$0x3f]
      %596 = vrot.lane.b32.xlu0 %v410, 32
      %v597 = vpop.permute.xlu0 %596
      %v598 = vrot.slane %v597, 6
      %vm599 = vcmask 261120
      %v600 = vsel %vm599, %v598, %v597
      %v602 = vmul.bf16 %v595, %v600
      %v604 = vcombine.high %v602, %v602
      %v606 = vunpack.c.l.s4 1983009808
      %v607 = vunpack.c.0.s8 %v606
      %v608 = vlaneseq
      %v609 = vshrl.u32 %v608, 7
      %v610 = vsub.s32 %v607, %v609
      %v611 = vrot.slane %v602, %v610
      %v613 = vunpack.c.l.s4 1983009808
      %v614 = vunpack.c.0.s8 %v613
      %v615 = vlaneseq
      %v616 = vshrl.u32 %v615, 7
      %v617 = vsub.s32 %v614, %v616
      %v618 = vrot.slane %v604, %v617
      %619 = vrot.lane.b32.xlu0 %v611, 96
      %v620 = vpop.permute.xlu0 %619
      %621 = vrot.lane.b32.xlu0 %v618, 96
      %v622 = vpop.permute.xlu0 %621
      %v623 = vrot.slane %v620, 4
      %v624 = vrot.slane %v622, 4
      %v625 = vsel %vm446, %v623, %v624
      %vm626 = vcmask 785408
      %v627 = vsel %vm626, %v620, %v625
      %629 = vst [vmem:[#allocation4 + $0x18] sm:$0x33] %v627
      %v630 = vld [vmem:[#allocation2] sm:$0x3f]
      %v632 = vcombine.low %v630, %v630
      %v634 = vunpack.c.l.s4 1983009808
      %v635 = vunpack.c.0.s8 %v634
      %v636 = vlaneseq
      %v637 = vshrl.u32 %v636, 7
      %v638 = vsub.s32 %v635, %v637
      %v639 = vrot.slane %v632, %v638
      %v641 = vunpack.c.l.s4 1983009808
      %v642 = vunpack.c.0.s8 %v641
      %v643 = vlaneseq
      %v644 = vshrl.u32 %v643, 7
      %v645 = vsub.s32 %v642, %v644
      %v646 = vrot.slane %v630, %v645
      %647 = vrot.lane.b32.xlu0 %v639, 95
      %v648 = vpop.permute.xlu0 %647
      %649 = vrot.lane.b32.xlu0 %v646, 95
      %v650 = vpop.permute.xlu0 %649
      %v651 = vrot.slane %v648, 4
      %v652 = vrot.slane %v650, 4
      %v653 = vsel %vm446, %v651, %v652
      %vm654 = vcmask 777216
      %v655 = vsel %vm654, %v648, %v653
      %657 = vst [vmem:[#allocation4 + $0x18] sm:$0xcc] %v655
      %v658 = vld [vmem:[#allocation2] sm:$0x3f]
      %659 = vrot.lane.b32.xlu0 %v462, 34
      %v660 = vpop.permute.xlu0 %659
      %v661 = vrot.slane %v660, 6
      %vm662 = vcmask 277504
      %v663 = vsel %vm662, %v661, %v660
      %v665 = vmul.bf16 %v658, %v663
      %v667 = vcombine.high %v665, %v665
      %v669 = vunpack.c.l.s4 1983009808
      %v670 = vunpack.c.0.s8 %v669
      %v671 = vlaneseq
      %v672 = vshrl.u32 %v671, 7
      %v673 = vsub.s32 %v670, %v672
      %v674 = vrot.slane %v665, %v673
      %v676 = vunpack.c.l.s4 1983009808
      %v677 = vunpack.c.0.s8 %v676
      %v678 = vlaneseq
      %v679 = vshrl.u32 %v678, 7
      %v680 = vsub.s32 %v677, %v679
      %v681 = vrot.slane %v667, %v680
      %682 = vrot.lane.b32.xlu0 %v674, 94
      %v683 = vpop.permute.xlu0 %682
      %684 = vrot.lane.b32.xlu0 %v681, 94
      %v685 = vpop.permute.xlu0 %684
      %v686 = vrot.slane %v683, 4
      %v687 = vrot.slane %v685, 4
      %v688 = vsel %vm446, %v686, %v687
      %vm689 = vcmask 769024
      %v690 = vsel %vm689, %v683, %v688
      %692 = vst [vmem:[#allocation4 + $0x20] sm:$0x33] %v690
      %v693 = vld [vmem:[#allocation4] sm:$0xff]
      %v694 = vld [vmem:[#allocation4 + $0x8] sm:$0xff]
      %v695 = vld [vmem:[#allocation4 + $0x10] sm:$0xff]
      %v696 = vld [vmem:[#allocation4 + $0x18] sm:$0xff]
      %v697 = vld [vmem:[#allocation4 + $0x20] sm:$0x33]
      %699 = vset.pattern.permute.xlu0 0
      %700 = vperm.xlu0 %699, %v365
      %v701 = vpop.permute.xlu0 %700
      %v708 = vunpack.c.l.b16 %v693
      %v709 = vunpack.c.h.b16 %v693
      %v710 = vunpack.c.l.b16 %v694
      %v711 = vunpack.c.h.b16 %v694
      %v712 = vunpack.c.l.b16 %v695
      %v713 = vunpack.c.h.b16 %v695
      %v714 = vunpack.c.l.b16 %v696
      %v715 = vunpack.c.h.b16 %v696
      %v716 = vunpack.c.l.b16 %v697
      %v717 = vunpack.c.h.b16 %v697
      %v718 = vpack.c.b16 %v710, %v708
      %v719 = vpack.c.b16 %v711, %v709
      %v720 = vpack.c.b16 %v714, %v712
      %v721 = vpack.c.b16 %v715, %v713
      %v722 = vpack.c.b16 %v716, %v716
      %v723 = vpack.c.b16 %v717, %v717
      %vm728 = vcmask 293888
      %v730 = vsel %vm728, %v363, 0
      %vm732 = vcmask 1041408
      %v734 = vsel %vm732, %v722, 0
      %v737 = vsel %vm732, %v723, 0
      %739 = vmatprep.subr.bf16.mxu0 0
      %740 = vmatpush1.bf16.msra.mxu0 0
      %741 = vmatprep.subr.bf16.mxu0 0
      %742 = vmatpush1.bf16.msra.mxu0 0
      %743 = vmatprep.subr.bf16.mxu0 0
      %744 = vmatpush1.bf16.msra.mxu0 0
      %745 = vmatprep.subr.bf16.mxu0 0
      %746 = vmatpush1.bf16.msra.mxu0 0
      %747 = vmatprep.subr.bf16.mxu0 0
      %748 = vmatpush1.bf16.msra.mxu0 0
      %749 = vmatprep.subr.bf16.mxu0 %v737
      %750 = vmatpush1.bf16.msra.mxu0 %v734
      %751 = vmatprep.subr.bf16.mxu0 %v721
      %752 = vmatpush1.bf16.msra.mxu0 %v720
      %753 = vmatprep.subr.bf16.mxu0 %v719
      %754 = vmatpush1.bf16.msra.mxu0 %v718
      %755 = vmatprep.subr.bf16.mxu0 0
      %756 = vmatpush2.bf16.msra.mxu0 0
      %757 = vmatprep.subr.bf16.mxu0 0
      %758 = vmatpush2.bf16.msra.mxu0 0
      %759 = vmatprep.subr.bf16.mxu0 0
      %760 = vmatpush2.bf16.msra.mxu0 0
      %761 = vmatprep.subr.bf16.mxu0 0
      %762 = vmatpush2.bf16.msra.mxu0 0
      %763 = vmatprep.subr.bf16.mxu0 0
      %764 = vmatpush2.bf16.msra.mxu0 0
      %765 = vmatprep.subr.bf16.mxu0 0
      %766 = vmatpush2.bf16.msra.mxu0 0
      %767 = vmatprep.subr.bf16.mxu0 0
      %768 = vmatpush2.bf16.msra.mxu0 0
      %769 = vmatprep.subr.bf16.mxu0 0
      %770 = vmatpush2.bf16.msra.mxu0 0
      %771 = vmatprep.mubr.bf16.mxu0 0
      %772 = vmatmul.mubr.bf16.gmra.mxu0 %v730
      %v773 = vpop.f32.mrf.mxu0
      %v774 = vadd.f32 %v701, %v773
      %v775 = vpop.f32.mrf.mxu0
      %v776 = vadd.f32 %v701, %v775
      %v777 = vpop.f32.mrf.mxu0
      %v778 = vpop.f32.mrf.mxu0
      %779 = vdwg.mxu0
      %v780 = vmax.f32 %v774, 0.0
      %v781 = vmax.f32 %v776, 0.0
      %783 = vset.pattern.permute.xlu0 0
      %784 = vperm.xlu0 %783, %v367
      %v785 = vpop.permute.xlu0 %784
      %v787 = vadd.f32 %v780, %v785
      %v788 = vadd.f32 %v781, %v785
      %vm789 = vcmask 134144
      %790 = vst.msk [vmem:[#allocation3] sm:$0xf] %vm789, 0
      %vm791 = vcmask 273544
      %792 = vst.msk [vmem:[#allocation3 + $0x8] sm:$0xf] %vm791, 0
      %v793 = vpack.c.bf16 %v787, %v787
      %v794 = vpack.c.bf16 %v788, %v788
      %v797 = vunpack.c.l.b16 %v793
      %v798 = vunpack.c.l.b16 %v794
      %v799 = vpack.c.b16 %v798, %v797
      %800 = vrot.lane.b32.xlu0 %v799, 17
      %v801 = vpop.permute.xlu0 %800
      %v802 = vrot.slane %v801, 4
      %v803 = vsel %vm391, %v802, %v801
      %vm806 = vcmask 1043592
      %vm807 = vcmask 1047556
      %vm808 = vmor %vm807, %vm806
      %809 = vst.msk [vmem:[#allocation3] sm:$0xff] %vm808, %v803
      %810 = vst.msk [vmem:[#allocation3 + $0x8] sm:$0xf] %vm789, %v802
      %v811 = vld [vmem:[#allocation3] sm:$0xff]
      %v812 = vunpack.c.l.b16 %v355
      %v813 = vunpack.c.l.b16 %v356
      %v814 = vpack.c.b16 %v813, %v812
      %v816 = vmul.bf16 %v811, %v814
      %817 = vst [vmem:[#allocation5] sm:$0xff] %v816
      %v818 = vld [vmem:[#allocation3] sm:$0xff]
      %v819 = vld [vmem:[#allocation3 + $0x8] sm:$0xf]
      %822 = vrot.lane.b32.xlu0 %v818, 127
      %v823 = vpop.permute.xlu0 %822
      %824 = vrot.lane.b32.xlu0 %v819, 127
      %v825 = vpop.permute.xlu0 %824
      %v826 = vrot.slane %v823, 4
      %v827 = vrot.slane %v825, 4
      %v828 = vsel %vm446, %v826, %v827
      %v829 = vsel %vm448, %v823, %v828
      %831 = vst [vmem:[#allocation5 + $0x8] sm:$0xff] %v829
      %v832 = vld [vmem:[#allocation3] sm:$0xff]
      %v833 = vld [vmem:[#allocation3 + $0x8] sm:$0xf]
      %v834 = vunpack.c.l.b16 %v361
      %v835 = vunpack.c.l.b16 %v362
      %v836 = vpack.c.b16 %v835, %v834
      %837 = vrot.lane.b32.xlu0 %v836, 2
      %v838 = vpop.permute.xlu0 %837
      %v839 = vrot.slane %v838, 4
      %v840 = vsel %vm466, %v839, %v838
      %v843 = vmul.bf16 %v832, %v840
      %v844 = vmul.bf16 %v833, %v839
      %847 = vrot.lane.b32.xlu0 %v843, 126
      %v848 = vpop.permute.xlu0 %847
      %849 = vrot.lane.b32.xlu0 %v844, 126
      %v850 = vpop.permute.xlu0 %849
      %v851 = vrot.slane %v848, 4
      %v852 = vrot.slane %v850, 4
      %v853 = vsel %vm446, %v851, %v852
      %v854 = vsel %vm493, %v848, %v853
      %856 = vst [vmem:[#allocation5 + $0x10] sm:$0xff] %v854
      %v857 = vld [vmem:[#allocation3] sm:$0xff]
      %v858 = vld [vmem:[#allocation3 + $0x8] sm:$0xf]
      %859 = vrot.lane.b32.xlu0 %v814, 16
      %v860 = vpop.permute.xlu0 %859
      %v861 = vrot.slane %v860, 4
      %v862 = vsel %vm501, %v861, %v860
      %v865 = vmul.bf16 %v857, %v862
      %v866 = vmul.bf16 %v858, %v861
      %869 = vrot.lane.b32.xlu0 %v865, 112
      %v870 = vpop.permute.xlu0 %869
      %871 = vrot.lane.b32.xlu0 %v866, 112
      %v872 = vpop.permute.xlu0 %871
      %v873 = vrot.slane %v870, 4
      %v874 = vrot.slane %v872, 4
      %v875 = vsel %vm446, %v873, %v874
      %v876 = vsel %vm528, %v870, %v875
      %878 = vst [vmem:[#allocation5 + $0x18] sm:$0xff] %v876
      %v879 = vld [vmem:[#allocation3] sm:$0xff]
      %v880 = vld [vmem:[#allocation3 + $0x8] sm:$0xf]
      %883 = vrot.lane.b32.xlu0 %v879, 111
      %v884 = vpop.permute.xlu0 %883
      %885 = vrot.lane.b32.xlu0 %v880, 111
      %v886 = vpop.permute.xlu0 %885
      %v887 = vrot.slane %v884, 4
      %v888 = vrot.slane %v886, 4
      %v889 = vsel %vm446, %v887, %v888
      %v890 = vsel %vm556, %v884, %v889
      %892 = vst [vmem:[#allocation5 + $0x20] sm:$0xff] %v890
      %v893 = vld [vmem:[#allocation3] sm:$0xff]
      %v894 = vld [vmem:[#allocation3 + $0x8] sm:$0xf]
      %895 = vrot.lane.b32.xlu0 %v836, 18
      %v896 = vpop.permute.xlu0 %895
      %v897 = vrot.slane %v896, 4
      %v898 = vsel %vm564, %v897, %v896
      %v901 = vmul.bf16 %v893, %v898
      %v902 = vmul.bf16 %v894, %v897
      %905 = vrot.lane.b32.xlu0 %v901, 110
      %v906 = vpop.permute.xlu0 %905
      %907 = vrot.lane.b32.xlu0 %v902, 110
      %v908 = vpop.permute.xlu0 %907
      %v909 = vrot.slane %v906, 4
      %v910 = vrot.slane %v908, 4
      %v911 = vsel %vm446, %v909, %v910
      %v912 = vsel %vm591, %v906, %v911
      %914 = vst [vmem:[#allocation5 + $0x28] sm:$0xff] %v912
      %v915 = vld [vmem:[#allocation3] sm:$0xff]
      %v916 = vld [vmem:[#allocation3 + $0x8] sm:$0xf]
      %917 = vrot.lane.b32.xlu0 %v814, 32
      %v918 = vpop.permute.xlu0 %917
      %v919 = vrot.slane %v918, 4
      %v920 = vsel %vm599, %v919, %v918
      %v923 = vmul.bf16 %v915, %v920
      %v924 = vmul.bf16 %v916, %v919
      %927 = vrot.lane.b32.xlu0 %v923, 96
      %v928 = vpop.permute.xlu0 %927
      %929 = vrot.lane.b32.xlu0 %v924, 96
      %v930 = vpop.permute.xlu0 %929
      %v931 = vrot.slane %v928, 4
      %v932 = vrot.slane %v930, 4
      %v933 = vsel %vm446, %v931, %v932
      %v934 = vsel %vm626, %v928, %v933
      %936 = vst [vmem:[#allocation5 + $0x30] sm:$0xff] %v934
      %v937 = vld [vmem:[#allocation3] sm:$0xff]
      %v938 = vld [vmem:[#allocation3 + $0x8] sm:$0xf]
      %941 = vrot.lane.b32.xlu0 %v937, 95
      %v942 = vpop.permute.xlu0 %941
      %943 = vrot.lane.b32.xlu0 %v938, 95
      %v944 = vpop.permute.xlu0 %943
      %v945 = vrot.slane %v942, 4
      %v946 = vrot.slane %v944, 4
      %v947 = vsel %vm446, %v945, %v946
      %v948 = vsel %vm654, %v942, %v947
      %950 = vst [vmem:[#allocation5 + $0x38] sm:$0xff] %v948
      %v951 = vld [vmem:[#allocation3] sm:$0xff]
      %v952 = vld [vmem:[#allocation3 + $0x8] sm:$0xf]
      %953 = vrot.lane.b32.xlu0 %v836, 34
      %v954 = vpop.permute.xlu0 %953
      %v955 = vrot.slane %v954, 4
      %v956 = vsel %vm662, %v955, %v954
      %v959 = vmul.bf16 %v951, %v956
      %v960 = vmul.bf16 %v952, %v955
      %963 = vrot.lane.b32.xlu0 %v959, 94
      %v964 = vpop.permute.xlu0 %963
      %965 = vrot.lane.b32.xlu0 %v960, 94
      %v966 = vpop.permute.xlu0 %965
      %v967 = vrot.slane %v964, 4
      %v968 = vrot.slane %v966, 4
      %v969 = vsel %vm446, %v967, %v968
      %v970 = vsel %vm689, %v964, %v969
      %972 = vst [vmem:[#allocation5 + $0x40] sm:$0xff] %v970
      %v973 = vld [vmem:[#allocation5] sm:$0xff]
      %v974 = vld [vmem:[#allocation5 + $0x8] sm:$0xff]
      %v975 = vld [vmem:[#allocation5 + $0x10] sm:$0xff]
      %v976 = vld [vmem:[#allocation5 + $0x18] sm:$0xff]
      %v977 = vld [vmem:[#allocation5 + $0x20] sm:$0xff]
      %v978 = vld [vmem:[#allocation5 + $0x28] sm:$0xff]
      %v979 = vld [vmem:[#allocation5 + $0x30] sm:$0xff]
      %v980 = vld [vmem:[#allocation5 + $0x38] sm:$0xff]
      %v981 = vld [vmem:[#allocation5 + $0x40] sm:$0xff]
      %983 = vset.pattern.permute.xlu0 0
      %984 = vperm.xlu0 %983, %v366
      %v985 = vpop.permute.xlu0 %984
      %v996 = vunpack.c.l.b16 %v973
      %v997 = vunpack.c.h.b16 %v973
      %v998 = vunpack.c.l.b16 %v974
      %v999 = vunpack.c.h.b16 %v974
      %v1000 = vunpack.c.l.b16 %v975
      %v1001 = vunpack.c.h.b16 %v975
      %v1002 = vunpack.c.l.b16 %v976
      %v1003 = vunpack.c.h.b16 %v976
      %v1004 = vunpack.c.l.b16 %v977
      %v1005 = vunpack.c.h.b16 %v977
      %v1006 = vunpack.c.l.b16 %v978
      %v1007 = vunpack.c.h.b16 %v978
      %v1008 = vunpack.c.l.b16 %v979
      %v1009 = vunpack.c.h.b16 %v979
      %v1010 = vunpack.c.l.b16 %v980
      %v1011 = vunpack.c.h.b16 %v980
      %v1012 = vunpack.c.l.b16 %v981
      %v1013 = vunpack.c.h.b16 %v981
      %v1014 = vpack.c.b16 %v998, %v996
      %v1015 = vpack.c.b16 %v999, %v997
      %v1016 = vpack.c.b16 %v1002, %v1000
      %v1017 = vpack.c.b16 %v1003, %v1001
      %v1018 = vpack.c.b16 %v1006, %v1004
      %v1019 = vpack.c.b16 %v1007, %v1005
      %v1020 = vpack.c.b16 %v1010, %v1008
      %v1021 = vpack.c.b16 %v1011, %v1009
      %v1022 = vpack.c.b16 %v1012, %v1012
      %v1023 = vpack.c.b16 %v1013, %v1013
      %vm1032 = vcmask 588800
      %v1034 = vsel %vm1032, %v364, 0
      %vm1036 = vcmask 1043456
      %v1038 = vsel %vm1036, %v1022, 0
      %v1041 = vsel %vm1036, %v1023, 0
      %1043 = vmatprep.subr.bf16.mxu0 0
      %1044 = vmatpush1.bf16.msra.mxu0 0
      %1045 = vmatprep.subr.bf16.mxu0 0
      %1046 = vmatpush1.bf16.msra.mxu0 0
      %1047 = vmatprep.subr.bf16.mxu0 0
      %1048 = vmatpush1.bf16.msra.mxu0 0
      %1049 = vmatprep.subr.bf16.mxu0 %v1041
      %1050 = vmatpush1.bf16.msra.mxu0 %v1038
      %1051 = vmatprep.subr.bf16.mxu0 %v1021
      %1052 = vmatpush1.bf16.msra.mxu0 %v1020
      %1053 = vmatprep.subr.bf16.mxu0 %v1019
      %1054 = vmatpush1.bf16.msra.mxu0 %v1018
      %1055 = vmatprep.subr.bf16.mxu0 %v1017
      %1056 = vmatpush1.bf16.msra.mxu0 %v1016
      %1057 = vmatprep.subr.bf16.mxu0 %v1015
      %1058 = vmatpush1.bf16.msra.mxu0 %v1014
      %1059 = vmatprep.subr.bf16.mxu0 0
      %1060 = vmatpush2.bf16.msra.mxu0 0
      %1061 = vmatprep.subr.bf16.mxu0 0
      %1062 = vmatpush2.bf16.msra.mxu0 0
      %1063 = vmatprep.subr.bf16.mxu0 0
      %1064 = vmatpush2.bf16.msra.mxu0 0
      %1065 = vmatprep.subr.bf16.mxu0 0
      %1066 = vmatpush2.bf16.msra.mxu0 0
      %1067 = vmatprep.subr.bf16.mxu0 0
      %1068 = vmatpush2.bf16.msra.mxu0 0
      %1069 = vmatprep.subr.bf16.mxu0 0
      %1070 = vmatpush2.bf16.msra.mxu0 0
      %1071 = vmatprep.subr.bf16.mxu0 0
      %1072 = vmatpush2.bf16.msra.mxu0 0
      %1073 = vmatprep.subr.bf16.mxu0 0
      %1074 = vmatpush2.bf16.msra.mxu0 0
      %1075 = vmatprep.mubr.bf16.mxu0 0
      %1076 = vmatmul.mubr.bf16.gmra.mxu0 %v1034
      %v1077 = vpop.f32.mrf.mxu0
      %v1078 = vadd.f32 %v985, %v1077
      %v1079 = vpop.f32.mrf.mxu0
      %v1080 = vadd.f32 %v985, %v1079
      %v1081 = vpop.f32.mrf.mxu0
      %v1082 = vpop.f32.mrf.mxu0
      %1083 = vdwg.mxu0
      %v1084 = vmax.f32 %v1078, 0.0
      %v1085 = vmax.f32 %v1080, 0.0
      %v1086 = vld [vmem:[%s6] sm:$0xf]
      %v1087 = vld [vmem:[#allocation2] sm:$0x3f]
      %v1088 = vld [vmem:[%s7] sm:$0xff]
      %1090 = vset.pattern.permute.xlu0 0
      %1091 = vperm.xlu0 %1090, %v1088
      %v1092 = vpop.permute.xlu0 %1091
      %v1095 = vcombine.high %v1087, %v1087
      %v1097 = vunpack.c.l.s4 1983009808
      %v1098 = vunpack.c.0.s8 %v1097
      %v1099 = vlaneseq
      %v1100 = vshrl.u32 %v1099, 7
      %v1101 = vsub.s32 %v1098, %v1100
      %v1102 = vrot.slane %v1087, %v1101
      %v1104 = vunpack.c.l.s4 1983009808
      %v1105 = vunpack.c.0.s8 %v1104
      %v1106 = vlaneseq
      %v1107 = vshrl.u32 %v1106, 7
      %v1108 = vsub.s32 %v1105, %v1107
      %v1109 = vrot.slane %v1095, %v1108
      %v1110 = vcombine.high %v1102, %v1102
      %1111 = vrot.lane.b32.xlu0 %v1102, 111
      %v1112 = vpop.permute.xlu0 %1111
      %1113 = vrot.lane.b32.xlu0 %v1110, 111
      %v1114 = vpop.permute.xlu0 %1113
      %1115 = vrot.lane.b32.xlu0 %v1109, 111
      %v1116 = vpop.permute.xlu0 %1115
      %v1117 = vsel %vm556, %v1112, %v1114
      %v1118 = vsel %vm556, %v1114, %v1116
      %vm1119 = vcmask 31744
      %v1121 = vsel %vm1119, %v1086, 0
      %v1124 = vsel %vm732, %v1117, 0
      %v1127 = vsel %vm732, %v1118, 0
      %1129 = vmatprep.subr.bf16.mxu0 0
      %1130 = vmatpush1.bf16.msra.mxu0 0
      %1131 = vmatprep.subr.bf16.mxu0 0
      %1132 = vmatpush1.bf16.msra.mxu0 0
      %1133 = vmatprep.subr.bf16.mxu0 0
      %1134 = vmatpush1.bf16.msra.mxu0 0
      %1135 = vmatprep.subr.bf16.mxu0 0
      %1136 = vmatpush1.bf16.msra.mxu0 0
      %1137 = vmatprep.subr.bf16.mxu0 0
      %1138 = vmatpush1.bf16.msra.mxu0 0
      %1139 = vmatprep.subr.bf16.mxu0 0
      %1140 = vmatpush1.bf16.msra.mxu0 0
      %1141 = vmatprep.subr.bf16.mxu0 0
      %1142 = vmatpush1.bf16.msra.mxu0 0
      %1143 = vmatprep.subr.bf16.mxu0 %v1127
      %1144 = vmatpush1.bf16.msra.mxu0 %v1124
      %1145 = vmatprep.subr.bf16.mxu0 0
      %1146 = vmatpush2.bf16.msra.mxu0 0
      %1147 = vmatprep.subr.bf16.mxu0 0
      %1148 = vmatpush2.bf16.msra.mxu0 0
      %1149 = vmatprep.subr.bf16.mxu0 0
      %1150 = vmatpush2.bf16.msra.mxu0 0
      %1151 = vmatprep.subr.bf16.mxu0 0
      %1152 = vmatpush2.bf16.msra.mxu0 0
      %1153 = vmatprep.subr.bf16.mxu0 0
      %1154 = vmatpush2.bf16.msra.mxu0 0
      %1155 = vmatprep.subr.bf16.mxu0 0
      %1156 = vmatpush2.bf16.msra.mxu0 0
      %1157 = vmatprep.subr.bf16.mxu0 0
      %1158 = vmatpush2.bf16.msra.mxu0 0
      %1159 = vmatprep.subr.bf16.mxu0 0
      %1160 = vmatpush2.bf16.msra.mxu0 0
      %1161 = vmatprep.mubr.bf16.mxu0 0
      %1162 = vmatmul.mubr.bf16.gmra.mxu0 %v1121
      %v1163 = vpop.f32.mrf.mxu0
      %v1164 = vadd.f32 %v1092, %v1163
      %v1165 = vpop.f32.mrf.mxu0
      %v1166 = vadd.f32 %v1092, %v1165
      %v1167 = vpop.f32.mrf.mxu0
      %v1168 = vpop.f32.mrf.mxu0
      %1169 = vdwg.mxu0
      %v1170 = vadd.f32 %v1084, %v1164
      %v1171 = vadd.f32 %v1085, %v1166
      %1172 = vst [vmem:[%s322] sm:$0xff] %v1170
      %1173 = vst [vmem:[%s322 + $0x8] sm:$0xff] %v1171
      %p1174 = scmp.lt.s32.totalorder %s19, 1
      %s1175 = scalar_select %p1174, %s19, 1
      %s1176 = smul.addr %s1175, 2
      %s1177 = smul.addr %s1176, 8
      %s1178 = scalar_lea.vmem %s8, %s1177
      // Predicated region
      $region53: #{block_forward.1} parent=51 // pred_check
        %p1179 = pneg %p215
      $region54: #{block_forward.1} parent=51 // pred_check_branch
        %1181 = sbr.rel (%p1179) target = $region56
      $region55: #{block_forward.1} parent=51 // pred_region
        _
      $region56: #{block_forward.1} parent=51 // pred_fallthru
        _
    $region52: #{block_forward.1} parent=5 // pred_fallthru
      _
    %p1182 = scmp.le.s32.totalorder 2, %s14
    // Predicated region
    $region57: #{block_forward.1} parent=5 // pred_check
      %p1183 = pneg %p1182
    $region58: #{block_forward.1} parent=5 // pred_check_branch
      %1185 = sbr.rel (%p1183) target = $region60
    $region59: #{block_forward.1} parent=5 // pred_region
      %s1186 = ssub.s32 %s14, 2
      // Predicated region
      $region61: #{block_forward.1} parent=59 // pred_check
        %p1187 = pneg %p221
      $region62: #{block_forward.1} parent=59 // pred_check_branch
        %1189 = sbr.rel (%p1187) target = $region64
      $region63: #{block_forward.1} parent=59 // pred_region
        %p1190 = scmp.lt.s32.totalorder %s20, 1
        %s1191 = scalar_select %p1190, %s20, 1
        %s1192 = smul.addr %s1191, 2
        %s1193 = smul.addr %s1192, 8
        %s1194 = scalar_lea.vmem %s8, %s1193
      $region64: #{block_forward.1} parent=59 // pred_fallthru
        _
    $region60: #{block_forward.1} parent=5 // pred_fallthru
      _
  $region6: #{block_forward.1} parent=0 // loop_footer
    %s18 = sadd.s32 1, %s14
  $region7: #{block_forward.1} parent=0 // loop_footer_branch
    %13 = sbr.rel target = $region3
  $region8: #{block_forward.1} parent=0 // loop_exit
    _

</llo_original>
